<compile_context>
chip_gen: v6e
topology: v6e:2x2x1
jax: 0.10.0
libtpu: 0.0.40
codegen_flags: <defaults>
</compile_context>

<pallas_src>
import functools

import jax
import jax.numpy as jnp
import numpy as np
from jax import lax
from jax.experimental import pallas as pl
from jax.experimental.pallas import tpu as pltpu


def _round_up(x, m):
  return -(-x // m) * m


# ----------------------------- Pallas kernel ------------------------------

def _transe_gather_score_kernel(
    head_ids_ref, rel_ids_ref, tail_ids_ref,   # scalar prefetch (SMEM), (B_padded,)
    entity_hbm,                                # entity table, memory_space=ANY (HBM)
    rel_vmem,                                  # relation table, VMEM-resident block
    out_ref,                                   # (1, tb) VMEM output block
    h_buf, t_buf,                              # (2, tb, D) double-buffered staging
    r_buf,                                     # (tb, D) relation staging (local copies)
    h_sem, t_sem,                              # DMA semaphores, shape (2,) each
    *, tb, gamma, num_tiles, unroll):
  i = pl.program_id(0)
  slot = i % 2

  # ---- gather issue: one row-DMA per head / tail id of a tile --------------
  def issue_tile(tile_idx, s):
    base = tile_idx * tb                       # hoisted out of the row loop

    def body(row, carry):
      h_id = head_ids_ref[base + row]
      t_id = tail_ids_ref[base + row]
      pltpu.make_async_copy(entity_hbm.at[h_id], h_buf.at[s, row], h_sem.at[s]).start()
      pltpu.make_async_copy(entity_hbm.at[t_id], t_buf.at[s, row], t_sem.at[s]).start()
      return carry

    lax.fori_loop(0, tb, body, 0, unroll=unroll)

  # Prime: first grid step issues its own tile's gathers into slot 0.
  @pl.when(i == 0)
  def _():
    issue_tile(0, 0)

  # Cross-tile double buffering: issue tile i+1 into the other slot before we
  # wait on / consume tile i (safe: different slot; previous use already done).
  @pl.when(i + 1 < num_tiles)
  def _():
    issue_tile(i + 1, (i + 1) % 2)

  # ---- relation gather from the VMEM-resident table ------------------------
  # Runs while the head/tail DMAs are in flight; pure vld/vst work (no HBM).
  base = i * tb

  def rel_gather(row, carry):
    r_id = rel_ids_ref[base + row]
    r_buf[pl.ds(row, 1), :] = rel_vmem[pl.ds(r_id, 1), :]
    return carry

  lax.fori_loop(0, tb, rel_gather, 0, unroll=unroll)

  # ---- bulk waits -----------------------------------------------------------
  # DMA semaphores count bytes: tb single-row copies signal exactly one full
  # (tb, D) buffer's worth, so one whole-buffer wait per stream suffices.
  pltpu.make_async_copy(h_buf.at[slot], h_buf.at[slot], h_sem.at[slot]).wait()
  pltpu.make_async_copy(t_buf.at[slot], t_buf.at[slot], t_sem.at[slot]).wait()

  # ---- TransE '1-chain' score (VPU add/abs + lane reduce), lane-dense store -
  diff = h_buf[slot] + r_buf[...] - t_buf[slot]          # (tb, D)
  score = gamma - jnp.sum(jnp.abs(diff), axis=-1)        # (tb,)
  out_ref[...] = score.reshape(1, tb)


def transe_score_pallas(entity_emb, relation_emb, head_ids, rel_ids, tail_ids,
                        gamma, *, tile_b=512, vmem_budget_bytes=48 << 20):
  """Fused gather + TransE score.  Returns (B, 1) float32."""
  B = int(head_ids.shape[0])
  D = int(entity_emb.shape[1])
  nrel = int(relation_emb.shape[0])
  assert int(relation_emb.shape[1]) == D

  head_ids = jnp.asarray(head_ids, dtype=jnp.int32)
  rel_ids = jnp.asarray(rel_ids, dtype=jnp.int32)
  tail_ids = jnp.asarray(tail_ids, dtype=jnp.int32)

  # ---- tile sizing (lane-dense 128-multiples when multi-tile) ---------------
  tile_b = _round_up(max(tile_b, 128), 128)
  if B > tile_b:
    nt = -(-B // tile_b)
    tb = _round_up(-(-B // nt), 128)           # balance tiles, keep 128-multiple
  elif B > 128:
    tb = 128
  else:
    tb = _round_up(max(B, 8), 8)               # single tile spans the 8-padded batch

  # Re-derive against a VMEM budget (double-buffered h/t staging + r + table).
  def vmem_est(t):
    staging = (2 * 2 * t * D + t * D) * 4      # h/t x2 slots + r
    resident = 2 * nrel * D * 4                # relation table (pipeline 2x)
    out = 2 * 2 * t * 4                        # (1, t) output, double-buffered
    return staging + resident + out

  while tb > 128 and vmem_est(tb) > vmem_budget_bytes:
    tb -= 128

  num_tiles = -(-B // tb)
  b_padded = num_tiles * tb

  pad = b_padded - B
  if pad:
    zeros = jnp.zeros((pad,), jnp.int32)       # id 0 is always a valid gather row
    head_ids = jnp.concatenate([head_ids, zeros])
    rel_ids = jnp.concatenate([rel_ids, zeros])
    tail_ids = jnp.concatenate([tail_ids, zeros])

  kernel = functools.partial(_transe_gather_score_kernel,
                             tb=tb, gamma=float(gamma),
                             num_tiles=num_tiles, unroll=8)

  cp_kwargs = dict(dimension_semantics=("arbitrary",))
  est = vmem_est(tb)
  if est > (16 << 20):                         # raise scoped VMEM only if needed
    cp_kwargs["vmem_limit_bytes"] = int(min(est + (4 << 20), 56 << 20))

  out = pl.pallas_call(
      kernel,
      out_shape=jax.ShapeDtypeStruct((1, b_padded), jnp.float32),
      grid_spec=pltpu.PrefetchScalarGridSpec(
          num_scalar_prefetch=3,               # head / relation / tail id columns
          grid=(num_tiles,),
          in_specs=[
              pl.BlockSpec(memory_space=pl.ANY),               # entity table (HBM)
              pl.BlockSpec((nrel, D), lambda i, *_: (0, 0)),   # relation table (VMEM-resident)
          ],
          out_specs=pl.BlockSpec((1, tb), lambda i, *_: (0, i)),
          scratch_shapes=[
              pltpu.VMEM((2, tb, D), jnp.float32),   # head rows (double-buffered)
              pltpu.VMEM((2, tb, D), jnp.float32),   # tail rows (double-buffered)
              pltpu.VMEM((tb, D), jnp.float32),      # relation rows
              pltpu.SemaphoreType.DMA((2,)),         # head-stream sems per slot
              pltpu.SemaphoreType.DMA((2,)),         # tail-stream sems per slot
          ],
      ),
      compiler_params=pltpu.CompilerParams(**cp_kwargs),
  )(head_ids, rel_ids, tail_ids, entity_emb, relation_emb)

  return out[0, :B][:, None]                   # (B, 1), matching the PyTorch output


# --------------------------- Model (JAX glue) ------------------------------

class KGEModelPallas:
  """JAX/Pallas port of KGEModel for model_name='TransE',
  qtype='1-chain', mode='single'."""

  def __init__(self, model_name, nentity, nrelation, hidden_dim, gamma, key):
    assert model_name == "TransE"
    self.model_name = model_name
    self.hidden_dim = hidden_dim
    self.epsilon = 2.0
    self.gamma = float(gamma)
    self.embedding_range = (self.gamma + self.epsilon) / hidden_dim
    self.entity_dim = hidden_dim
    self.relation_dim = hidden_dim

    k1, k2 = jax.random.split(key)
    self.entity_embedding = jax.random.uniform(
        k1, (nentity, self.entity_dim), jnp.float32,
        minval=-self.embedding_range, maxval=self.embedding_range)
    self.relation_embedding = jax.random.uniform(
        k2, (nrelation, self.relation_dim), jnp.float32,
        minval=-self.embedding_range, maxval=self.embedding_range)

  def forward(self, sample, mode="single", qtype="1-chain", tile_b=512):
    assert mode == "single" and qtype == "1-chain"
    head_ids = sample[:, 0].astype(jnp.int32)
    rel_ids = sample[:, 2].astype(jnp.int32)
    tail_ids = sample[:, -1].astype(jnp.int32)
    return transe_score_pallas(self.entity_embedding, self.relation_embedding,
                               head_ids, rel_ids, tail_ids, self.gamma,
                               tile_b=tile_b)


# ------------------------------- Driver -------------------------------------

def _reference_score(model, sample):
  """Pure-JAX reference mirroring the PyTorch TransE '1-chain' path."""
  head = jnp.take(model.entity_embedding, sample[:, 0], axis=0)
  rel = jnp.take(model.relation_embedding, sample[:, 2], axis=0)
  tail = jnp.take(model.entity_embedding, sample[:, -1], axis=0)
  return model.gamma - jnp.sum(jnp.abs(head + rel - tail), axis=-1, keepdims=True)


def _make_sample(key, batch, nentity, nrelation):
  kh, kr, kt = jax.random.split(key, 3)
  heads = jax.random.randint(kh, (batch, 1), 0, nentity, dtype=jnp.int32)
  rels = jax.random.randint(kr, (batch, 1), 0, nrelation, dtype=jnp.int32)
  tails = jax.random.randint(kt, (batch, 1), 0, nentity, dtype=jnp.int32)
  # sample columns: [head, head_2 (unused for 1-chain), relation, tail]
  return jnp.concatenate([heads, heads, rels, tails], axis=1)


if __name__ == "__main__":
  key = jax.random.PRNGKey(0)
  k_model, k_sample = jax.random.split(key)

  nentity, nrelation, hidden_dim, gamma = 64, 16, 128, 12.0
  batch = 8

  model = KGEModelPallas("TransE", nentity, nrelation, hidden_dim, gamma, k_model)

  # Small single-tile case.
  sample = _make_sample(k_sample, batch, nentity, nrelation)
  score = jax.block_until_ready(model.forward(sample))
  ref = jax.block_until_ready(_reference_score(model, sample))
  np.testing.assert_allclose(np.asarray(score), np.asarray(ref),
                             rtol=1e-5, atol=1e-5)

  # Ragged multi-tile case (exercises cdiv + padding + lane-dense 128 tiles +
  # the cross-tile double-buffered gather path, 3 grid steps).
  sample2 = _make_sample(jax.random.PRNGKey(1), 300, nentity, nrelation)
  score2 = jax.block_until_ready(model.forward(sample2, tile_b=128))
  ref2 = jax.block_until_ready(_reference_score(model, sample2))
  np.testing.assert_allclose(np.asarray(score2), np.asarray(ref2),
                             rtol=1e-5, atol=1e-5)

  print("KERNEL_OK")
</pallas_src>

<mosaic_0001>
module attributes {stable_mosaic.version = 11 : i64} {
  func.func @_transe_gather_score_kernel(%arg0: i32, %arg1: memref<8xi32, #tpu.memory_space<smem>>, %arg2: memref<8xi32, #tpu.memory_space<smem>>, %arg3: memref<8xi32, #tpu.memory_space<smem>>, %arg4: memref<64x128xf32, #tpu.memory_space<any>>, %arg5: memref<16x128xf32, #tpu.memory_space<vmem>>, %arg6: memref<1x8xf32, #tpu.memory_space<vmem>>, %arg7: memref<2x8x128xf32, #tpu.memory_space<vmem>>, %arg8: memref<2x8x128xf32, #tpu.memory_space<vmem>>, %arg9: memref<8x128xf32, #tpu.memory_space<vmem>>, %arg10: memref<2x!tpu.dma_semaphore, #tpu.memory_space<semaphore_mem>>, %arg11: memref<2x!tpu.dma_semaphore, #tpu.memory_space<semaphore_mem>>) attributes {dimension_semantics = [#tpu.dimension_semantics<arbitrary>], iteration_bounds = array<i64: 1>, scalar_prefetch = 3 : i64, scratch_operands = 5 : i64, tpu.core_type = #tpu.core_type<tc>, window_params = [{}, {pipeline_mode = #tpu.pipeline_mode<synchronous>, transform_indices = @transform_1, window_bounds = array<i64: 16, 128>}, {transform_indices = @transform_2, window_bounds = array<i64: 1, 8>}]} {
    %c2_i32 = arith.constant 2 : i32
    %c0_i32 = arith.constant 0 : i32
    %0 = arith.cmpi eq, %c2_i32, %c0_i32 : i32
    %c1_i32 = arith.constant 1 : i32
    %1 = arith.select %0, %c1_i32, %c2_i32 : i32
    %2 = arith.remsi %arg0, %1 : i32
    %c0_i32_0 = arith.constant 0 : i32
    %3 = arith.cmpi ne, %2, %c0_i32_0 : i32
    %c0_i32_1 = arith.constant 0 : i32
    %4 = arith.cmpi slt, %2, %c0_i32_1 : i32
    %c0_i32_2 = arith.constant 0 : i32
    %5 = arith.cmpi slt, %1, %c0_i32_2 : i32
    %6 = arith.xori %4, %5 : i1
    %7 = arith.andi %6, %3 : i1
    %8 = arith.addi %2, %1 : i32
    %9 = arith.select %7, %8, %2 : i32
    %c0_i32_3 = arith.constant 0 : i32
    %10 = arith.cmpi eq, %arg0, %c0_i32_3 : i32
    %11 = arith.extui %10 : i1 to i32
    %c0_i32_4 = arith.constant 0 : i32
    %12 = arith.cmpi ne, %11, %c0_i32_4 : i32
    scf.if %12 {
      %c0_i32_44 = arith.constant 0 : i32
      %c0_i32_45 = arith.constant 0 : i32
      %101 = arith.addi %c0_i32_45, %c0_i32_44 : i32
      %102 = arith.index_cast %101 : i32 to index
      %103 = memref.load %arg1[%102] : memref<8xi32, #tpu.memory_space<smem>>
      %c0_i32_46 = arith.constant 0 : i32
      %104 = arith.addi %c0_i32_46, %c0_i32_44 : i32
      %105 = arith.index_cast %104 : i32 to index
      %106 = memref.load %arg3[%105] : memref<8xi32, #tpu.memory_space<smem>>
      %c0_i32_47 = arith.constant 0 : i32
      %c0_i32_48 = arith.constant 0 : i32
      %c0_i32_49 = arith.constant 0 : i32
      %107 = tpu.memref_slice %arg4[%103, %c0_i32_49] : memref<64x128xf32, #tpu.memory_space<any>> -> memref<1x128xf32, #tpu.memory_space<any>>
      %108 = tpu.memref_squeeze %107 : memref<1x128xf32, #tpu.memory_space<any>> -> memref<128xf32, #tpu.memory_space<any>>
      %c0_i32_50 = arith.constant 0 : i32
      %109 = tpu.memref_slice %arg7[%c0_i32_47, %c0_i32_44, %c0_i32_50] : memref<2x8x128xf32, #tpu.memory_space<vmem>> -> memref<1x1x128xf32, #tpu.memory_space<vmem>>
      %110 = tpu.memref_squeeze %109 : memref<1x1x128xf32, #tpu.memory_space<vmem>> -> memref<128xf32, #tpu.memory_space<vmem>>
      %111 = tpu.memref_slice %arg10[%c0_i32_48] : memref<2x!tpu.dma_semaphore, #tpu.memory_space<semaphore_mem>> -> memref<1x!tpu.dma_semaphore, #tpu.memory_space<semaphore_mem>>
      %112 = tpu.memref_squeeze %111 : memref<1x!tpu.dma_semaphore, #tpu.memory_space<semaphore_mem>> -> memref<!tpu.dma_semaphore, #tpu.memory_space<semaphore_mem>>
      tpu.enqueue_dma source(%108 : memref<128xf32, #tpu.memory_space<any>>) target(%110 : memref<128xf32, #tpu.memory_space<vmem>>) target_semaphore(%112 : memref<!tpu.dma_semaphore, #tpu.memory_space<semaphore_mem>>)
      %c0_i32_51 = arith.constant 0 : i32
      %c0_i32_52 = arith.constant 0 : i32
      %c0_i32_53 = arith.constant 0 : i32
      %113 = tpu.memref_slice %arg4[%106, %c0_i32_53] : memref<64x128xf32, #tpu.memory_space<any>> -> memref<1x128xf32, #tpu.memory_space<any>>
      %114 = tpu.memref_squeeze %113 : memref<1x128xf32, #tpu.memory_space<any>> -> memref<128xf32, #tpu.memory_space<any>>
      %c0_i32_54 = arith.constant 0 : i32
      %115 = tpu.memref_slice %arg8[%c0_i32_51, %c0_i32_44, %c0_i32_54] : memref<2x8x128xf32, #tpu.memory_space<vmem>> -> memref<1x1x128xf32, #tpu.memory_space<vmem>>
      %116 = tpu.memref_squeeze %115 : memref<1x1x128xf32, #tpu.memory_space<vmem>> -> memref<128xf32, #tpu.memory_space<vmem>>
      %117 = tpu.memref_slice %arg11[%c0_i32_52] : memref<2x!tpu.dma_semaphore, #tpu.memory_space<semaphore_mem>> -> memref<1x!tpu.dma_semaphore, #tpu.memory_space<semaphore_mem>>
      %118 = tpu.memref_squeeze %117 : memref<1x!tpu.dma_semaphore, #tpu.memory_space<semaphore_mem>> -> memref<!tpu.dma_semaphore, #tpu.memory_space<semaphore_mem>>
      tpu.enqueue_dma source(%114 : memref<128xf32, #tpu.memory_space<any>>) target(%116 : memref<128xf32, #tpu.memory_space<vmem>>) target_semaphore(%118 : memref<!tpu.dma_semaphore, #tpu.memory_space<semaphore_mem>>)
      %c1_i32_55 = arith.constant 1 : i32
      %c0_i32_56 = arith.constant 0 : i32
      %119 = arith.addi %c0_i32_56, %c1_i32_55 : i32
      %120 = arith.index_cast %119 : i32 to index
      %121 = memref.load %arg1[%120] : memref<8xi32, #tpu.memory_space<smem>>
      %c0_i32_57 = arith.constant 0 : i32
      %122 = arith.addi %c0_i32_57, %c1_i32_55 : i32
      %123 = arith.index_cast %122 : i32 to index
      %124 = memref.load %arg3[%123] : memref<8xi32, #tpu.memory_space<smem>>
      %c0_i32_58 = arith.constant 0 : i32
      %c0_i32_59 = arith.constant 0 : i32
      %c0_i32_60 = arith.constant 0 : i32
      %125 = tpu.memref_slice %arg4[%121, %c0_i32_60] : memref<64x128xf32, #tpu.memory_space<any>> -> memref<1x128xf32, #tpu.memory_space<any>>
      %126 = tpu.memref_squeeze %125 : memref<1x128xf32, #tpu.memory_space<any>> -> memref<128xf32, #tpu.memory_space<any>>
      %c0_i32_61 = arith.constant 0 : i32
      %127 = tpu.memref_slice %arg7[%c0_i32_58, %c1_i32_55, %c0_i32_61] : memref<2x8x128xf32, #tpu.memory_space<vmem>> -> memref<1x1x128xf32, #tpu.memory_space<vmem>>
      %128 = tpu.memref_squeeze %127 : memref<1x1x128xf32, #tpu.memory_space<vmem>> -> memref<128xf32, #tpu.memory_space<vmem>>
      %129 = tpu.memref_slice %arg10[%c0_i32_59] : memref<2x!tpu.dma_semaphore, #tpu.memory_space<semaphore_mem>> -> memref<1x!tpu.dma_semaphore, #tpu.memory_space<semaphore_mem>>
      %130 = tpu.memref_squeeze %129 : memref<1x!tpu.dma_semaphore, #tpu.memory_space<semaphore_mem>> -> memref<!tpu.dma_semaphore, #tpu.memory_space<semaphore_mem>>
      tpu.enqueue_dma source(%126 : memref<128xf32, #tpu.memory_space<any>>) target(%128 : memref<128xf32, #tpu.memory_space<vmem>>) target_semaphore(%130 : memref<!tpu.dma_semaphore, #tpu.memory_space<semaphore_mem>>)
      %c0_i32_62 = arith.constant 0 : i32
      %c0_i32_63 = arith.constant 0 : i32
      %c0_i32_64 = arith.constant 0 : i32
      %131 = tpu.memref_slice %arg4[%124, %c0_i32_64] : memref<64x128xf32, #tpu.memory_space<any>> -> memref<1x128xf32, #tpu.memory_space<any>>
      %132 = tpu.memref_squeeze %131 : memref<1x128xf32, #tpu.memory_space<any>> -> memref<128xf32, #tpu.memory_space<any>>
      %c0_i32_65 = arith.constant 0 : i32
      %133 = tpu.memref_slice %arg8[%c0_i32_62, %c1_i32_55, %c0_i32_65] : memref<2x8x128xf32, #tpu.memory_space<vmem>> -> memref<1x1x128xf32, #tpu.memory_space<vmem>>
      %134 = tpu.memref_squeeze %133 : memref<1x1x128xf32, #tpu.memory_space<vmem>> -> memref<128xf32, #tpu.memory_space<vmem>>
      %135 = tpu.memref_slice %arg11[%c0_i32_63] : memref<2x!tpu.dma_semaphore, #tpu.memory_space<semaphore_mem>> -> memref<1x!tpu.dma_semaphore, #tpu.memory_space<semaphore_mem>>
      %136 = tpu.memref_squeeze %135 : memref<1x!tpu.dma_semaphore, #tpu.memory_space<semaphore_mem>> -> memref<!tpu.dma_semaphore, #tpu.memory_space<semaphore_mem>>
      tpu.enqueue_dma source(%132 : memref<128xf32, #tpu.memory_space<any>>) target(%134 : memref<128xf32, #tpu.memory_space<vmem>>) target_semaphore(%136 : memref<!tpu.dma_semaphore, #tpu.memory_space<semaphore_mem>>)
      %c2_i32_66 = arith.constant 2 : i32
      %c0_i32_67 = arith.constant 0 : i32
      %137 = arith.addi %c0_i32_67, %c2_i32_66 : i32
      %138 = arith.index_cast %137 : i32 to index
      %139 = memref.load %arg1[%138] : memref<8xi32, #tpu.memory_space<smem>>
      %c0_i32_68 = arith.constant 0 : i32
      %140 = arith.addi %c0_i32_68, %c2_i32_66 : i32
      %141 = arith.index_cast %140 : i32 to index
      %142 = memref.load %arg3[%141] : memref<8xi32, #tpu.memory_space<smem>>
      %c0_i32_69 = arith.constant 0 : i32
      %c0_i32_70 = arith.constant 0 : i32
      %c0_i32_71 = arith.constant 0 : i32
      %143 = tpu.memref_slice %arg4[%139, %c0_i32_71] : memref<64x128xf32, #tpu.memory_space<any>> -> memref<1x128xf32, #tpu.memory_space<any>>
      %144 = tpu.memref_squeeze %143 : memref<1x128xf32, #tpu.memory_space<any>> -> memref<128xf32, #tpu.memory_space<any>>
      %c0_i32_72 = arith.constant 0 : i32
      %145 = tpu.memref_slice %arg7[%c0_i32_69, %c2_i32_66, %c0_i32_72] : memref<2x8x128xf32, #tpu.memory_space<vmem>> -> memref<1x1x128xf32, #tpu.memory_space<vmem>>
      %146 = tpu.memref_squeeze %145 : memref<1x1x128xf32, #tpu.memory_space<vmem>> -> memref<128xf32, #tpu.memory_space<vmem>>
      %147 = tpu.memref_slice %arg10[%c0_i32_70] : memref<2x!tpu.dma_semaphore, #tpu.memory_space<semaphore_mem>> -> memref<1x!tpu.dma_semaphore, #tpu.memory_space<semaphore_mem>>
      %148 = tpu.memref_squeeze %147 : memref<1x!tpu.dma_semaphore, #tpu.memory_space<semaphore_mem>> -> memref<!tpu.dma_semaphore, #tpu.memory_space<semaphore_mem>>
      tpu.enqueue_dma source(%144 : memref<128xf32, #tpu.memory_space<any>>) target(%146 : memref<128xf32, #tpu.memory_space<vmem>>) target_semaphore(%148 : memref<!tpu.dma_semaphore, #tpu.memory_space<semaphore_mem>>)
      %c0_i32_73 = arith.constant 0 : i32
      %c0_i32_74 = arith.constant 0 : i32
      %c0_i32_75 = arith.constant 0 : i32
      %149 = tpu.memref_slice %arg4[%142, %c0_i32_75] : memref<64x128xf32, #tpu.memory_space<any>> -> memref<1x128xf32, #tpu.memory_space<any>>
      %150 = tpu.memref_squeeze %149 : memref<1x128xf32, #tpu.memory_space<any>> -> memref<128xf32, #tpu.memory_space<any>>
      %c0_i32_76 = arith.constant 0 : i32
      %151 = tpu.memref_slice %arg8[%c0_i32_73, %c2_i32_66, %c0_i32_76] : memref<2x8x128xf32, #tpu.memory_space<vmem>> -> memref<1x1x128xf32, #tpu.memory_space<vmem>>
      %152 = tpu.memref_squeeze %151 : memref<1x1x128xf32, #tpu.memory_space<vmem>> -> memref<128xf32, #tpu.memory_space<vmem>>
      %153 = tpu.memref_slice %arg11[%c0_i32_74] : memref<2x!tpu.dma_semaphore, #tpu.memory_space<semaphore_mem>> -> memref<1x!tpu.dma_semaphore, #tpu.memory_space<semaphore_mem>>
      %154 = tpu.memref_squeeze %153 : memref<1x!tpu.dma_semaphore, #tpu.memory_space<semaphore_mem>> -> memref<!tpu.dma_semaphore, #tpu.memory_space<semaphore_mem>>
      tpu.enqueue_dma source(%150 : memref<128xf32, #tpu.memory_space<any>>) target(%152 : memref<128xf32, #tpu.memory_space<vmem>>) target_semaphore(%154 : memref<!tpu.dma_semaphore, #tpu.memory_space<semaphore_mem>>)
      %c3_i32_77 = arith.constant 3 : i32
      %c0_i32_78 = arith.constant 0 : i32
      %155 = arith.addi %c0_i32_78, %c3_i32_77 : i32
      %156 = arith.index_cast %155 : i32 to index
      %157 = memref.load %arg1[%156] : memref<8xi32, #tpu.memory_space<smem>>
      %c0_i32_79 = arith.constant 0 : i32
      %158 = arith.addi %c0_i32_79, %c3_i32_77 : i32
      %159 = arith.index_cast %158 : i32 to index
      %160 = memref.load %arg3[%159] : memref<8xi32, #tpu.memory_space<smem>>
      %c0_i32_80 = arith.constant 0 : i32
      %c0_i32_81 = arith.constant 0 : i32
      %c0_i32_82 = arith.constant 0 : i32
      %161 = tpu.memref_slice %arg4[%157, %c0_i32_82] : memref<64x128xf32, #tpu.memory_space<any>> -> memref<1x128xf32, #tpu.memory_space<any>>
      %162 = tpu.memref_squeeze %161 : memref<1x128xf32, #tpu.memory_space<any>> -> memref<128xf32, #tpu.memory_space<any>>
      %c0_i32_83 = arith.constant 0 : i32
      %163 = tpu.memref_slice %arg7[%c0_i32_80, %c3_i32_77, %c0_i32_83] : memref<2x8x128xf32, #tpu.memory_space<vmem>> -> memref<1x1x128xf32, #tpu.memory_space<vmem>>
      %164 = tpu.memref_squeeze %163 : memref<1x1x128xf32, #tpu.memory_space<vmem>> -> memref<128xf32, #tpu.memory_space<vmem>>
      %165 = tpu.memref_slice %arg10[%c0_i32_81] : memref<2x!tpu.dma_semaphore, #tpu.memory_space<semaphore_mem>> -> memref<1x!tpu.dma_semaphore, #tpu.memory_space<semaphore_mem>>
      %166 = tpu.memref_squeeze %165 : memref<1x!tpu.dma_semaphore, #tpu.memory_space<semaphore_mem>> -> memref<!tpu.dma_semaphore, #tpu.memory_space<semaphore_mem>>
      tpu.enqueue_dma source(%162 : memref<128xf32, #tpu.memory_space<any>>) target(%164 : memref<128xf32, #tpu.memory_space<vmem>>) target_semaphore(%166 : memref<!tpu.dma_semaphore, #tpu.memory_space<semaphore_mem>>)
      %c0_i32_84 = arith.constant 0 : i32
      %c0_i32_85 = arith.constant 0 : i32
      %c0_i32_86 = arith.constant 0 : i32
      %167 = tpu.memref_slice %arg4[%160, %c0_i32_86] : memref<64x128xf32, #tpu.memory_space<any>> -> memref<1x128xf32, #tpu.memory_space<any>>
      %168 = tpu.memref_squeeze %167 : memref<1x128xf32, #tpu.memory_space<any>> -> memref<128xf32, #tpu.memory_space<any>>
      %c0_i32_87 = arith.constant 0 : i32
      %169 = tpu.memref_slice %arg8[%c0_i32_84, %c3_i32_77, %c0_i32_87] : memref<2x8x128xf32, #tpu.memory_space<vmem>> -> memref<1x1x128xf32, #tpu.memory_space<vmem>>
      %170 = tpu.memref_squeeze %169 : memref<1x1x128xf32, #tpu.memory_space<vmem>> -> memref<128xf32, #tpu.memory_space<vmem>>
      %171 = tpu.memref_slice %arg11[%c0_i32_85] : memref<2x!tpu.dma_semaphore, #tpu.memory_space<semaphore_mem>> -> memref<1x!tpu.dma_semaphore, #tpu.memory_space<semaphore_mem>>
      %172 = tpu.memref_squeeze %171 : memref<1x!tpu.dma_semaphore, #tpu.memory_space<semaphore_mem>> -> memref<!tpu.dma_semaphore, #tpu.memory_space<semaphore_mem>>
      tpu.enqueue_dma source(%168 : memref<128xf32, #tpu.memory_space<any>>) target(%170 : memref<128xf32, #tpu.memory_space<vmem>>) target_semaphore(%172 : memref<!tpu.dma_semaphore, #tpu.memory_space<semaphore_mem>>)
      %c4_i32_88 = arith.constant 4 : i32
      %c0_i32_89 = arith.constant 0 : i32
      %173 = arith.addi %c0_i32_89, %c4_i32_88 : i32
      %174 = arith.index_cast %173 : i32 to index
      %175 = memref.load %arg1[%174] : memref<8xi32, #tpu.memory_space<smem>>
      %c0_i32_90 = arith.constant 0 : i32
      %176 = arith.addi %c0_i32_90, %c4_i32_88 : i32
      %177 = arith.index_cast %176 : i32 to index
      %178 = memref.load %arg3[%177] : memref<8xi32, #tpu.memory_space<smem>>
      %c0_i32_91 = arith.constant 0 : i32
      %c0_i32_92 = arith.constant 0 : i32
      %c0_i32_93 = arith.constant 0 : i32
      %179 = tpu.memref_slice %arg4[%175, %c0_i32_93] : memref<64x128xf32, #tpu.memory_space<any>> -> memref<1x128xf32, #tpu.memory_space<any>>
      %180 = tpu.memref_squeeze %179 : memref<1x128xf32, #tpu.memory_space<any>> -> memref<128xf32, #tpu.memory_space<any>>
      %c0_i32_94 = arith.constant 0 : i32
      %181 = tpu.memref_slice %arg7[%c0_i32_91, %c4_i32_88, %c0_i32_94] : memref<2x8x128xf32, #tpu.memory_space<vmem>> -> memref<1x1x128xf32, #tpu.memory_space<vmem>>
      %182 = tpu.memref_squeeze %181 : memref<1x1x128xf32, #tpu.memory_space<vmem>> -> memref<128xf32, #tpu.memory_space<vmem>>
      %183 = tpu.memref_slice %arg10[%c0_i32_92] : memref<2x!tpu.dma_semaphore, #tpu.memory_space<semaphore_mem>> -> memref<1x!tpu.dma_semaphore, #tpu.memory_space<semaphore_mem>>
      %184 = tpu.memref_squeeze %183 : memref<1x!tpu.dma_semaphore, #tpu.memory_space<semaphore_mem>> -> memref<!tpu.dma_semaphore, #tpu.memory_space<semaphore_mem>>
      tpu.enqueue_dma source(%180 : memref<128xf32, #tpu.memory_space<any>>) target(%182 : memref<128xf32, #tpu.memory_space<vmem>>) target_semaphore(%184 : memref<!tpu.dma_semaphore, #tpu.memory_space<semaphore_mem>>)
      %c0_i32_95 = arith.constant 0 : i32
      %c0_i32_96 = arith.constant 0 : i32
      %c0_i32_97 = arith.constant 0 : i32
      %185 = tpu.memref_slice %arg4[%178, %c0_i32_97] : memref<64x128xf32, #tpu.memory_space<any>> -> memref<1x128xf32, #tpu.memory_space<any>>
      %186 = tpu.memref_squeeze %185 : memref<1x128xf32, #tpu.memory_space<any>> -> memref<128xf32, #tpu.memory_space<any>>
      %c0_i32_98 = arith.constant 0 : i32
      %187 = tpu.memref_slice %arg8[%c0_i32_95, %c4_i32_88, %c0_i32_98] : memref<2x8x128xf32, #tpu.memory_space<vmem>> -> memref<1x1x128xf32, #tpu.memory_space<vmem>>
      %188 = tpu.memref_squeeze %187 : memref<1x1x128xf32, #tpu.memory_space<vmem>> -> memref<128xf32, #tpu.memory_space<vmem>>
      %189 = tpu.memref_slice %arg11[%c0_i32_96] : memref<2x!tpu.dma_semaphore, #tpu.memory_space<semaphore_mem>> -> memref<1x!tpu.dma_semaphore, #tpu.memory_space<semaphore_mem>>
      %190 = tpu.memref_squeeze %189 : memref<1x!tpu.dma_semaphore, #tpu.memory_space<semaphore_mem>> -> memref<!tpu.dma_semaphore, #tpu.memory_space<semaphore_mem>>
      tpu.enqueue_dma source(%186 : memref<128xf32, #tpu.memory_space<any>>) target(%188 : memref<128xf32, #tpu.memory_space<vmem>>) target_semaphore(%190 : memref<!tpu.dma_semaphore, #tpu.memory_space<semaphore_mem>>)
      %c5_i32_99 = arith.constant 5 : i32
      %c0_i32_100 = arith.constant 0 : i32
      %191 = arith.addi %c0_i32_100, %c5_i32_99 : i32
      %192 = arith.index_cast %191 : i32 to index
      %193 = memref.load %arg1[%192] : memref<8xi32, #tpu.memory_space<smem>>
      %c0_i32_101 = arith.constant 0 : i32
      %194 = arith.addi %c0_i32_101, %c5_i32_99 : i32
      %195 = arith.index_cast %194 : i32 to index
      %196 = memref.load %arg3[%195] : memref<8xi32, #tpu.memory_space<smem>>
      %c0_i32_102 = arith.constant 0 : i32
      %c0_i32_103 = arith.constant 0 : i32
      %c0_i32_104 = arith.constant 0 : i32
      %197 = tpu.memref_slice %arg4[%193, %c0_i32_104] : memref<64x128xf32, #tpu.memory_space<any>> -> memref<1x128xf32, #tpu.memory_space<any>>
      %198 = tpu.memref_squeeze %197 : memref<1x128xf32, #tpu.memory_space<any>> -> memref<128xf32, #tpu.memory_space<any>>
      %c0_i32_105 = arith.constant 0 : i32
      %199 = tpu.memref_slice %arg7[%c0_i32_102, %c5_i32_99, %c0_i32_105] : memref<2x8x128xf32, #tpu.memory_space<vmem>> -> memref<1x1x128xf32, #tpu.memory_space<vmem>>
      %200 = tpu.memref_squeeze %199 : memref<1x1x128xf32, #tpu.memory_space<vmem>> -> memref<128xf32, #tpu.memory_space<vmem>>
      %201 = tpu.memref_slice %arg10[%c0_i32_103] : memref<2x!tpu.dma_semaphore, #tpu.memory_space<semaphore_mem>> -> memref<1x!tpu.dma_semaphore, #tpu.memory_space<semaphore_mem>>
      %202 = tpu.memref_squeeze %201 : memref<1x!tpu.dma_semaphore, #tpu.memory_space<semaphore_mem>> -> memref<!tpu.dma_semaphore, #tpu.memory_space<semaphore_mem>>
      tpu.enqueue_dma source(%198 : memref<128xf32, #tpu.memory_space<any>>) target(%200 : memref<128xf32, #tpu.memory_space<vmem>>) target_semaphore(%202 : memref<!tpu.dma_semaphore, #tpu.memory_space<semaphore_mem>>)
      %c0_i32_106 = arith.constant 0 : i32
      %c0_i32_107 = arith.constant 0 : i32
      %c0_i32_108 = arith.constant 0 : i32
      %203 = tpu.memref_slice %arg4[%196, %c0_i32_108] : memref<64x128xf32, #tpu.memory_space<any>> -> memref<1x128xf32, #tpu.memory_space<any>>
      %204 = tpu.memref_squeeze %203 : memref<1x128xf32, #tpu.memory_space<any>> -> memref<128xf32, #tpu.memory_space<any>>
      %c0_i32_109 = arith.constant 0 : i32
      %205 = tpu.memref_slice %arg8[%c0_i32_106, %c5_i32_99, %c0_i32_109] : memref<2x8x128xf32, #tpu.memory_space<vmem>> -> memref<1x1x128xf32, #tpu.memory_space<vmem>>
      %206 = tpu.memref_squeeze %205 : memref<1x1x128xf32, #tpu.memory_space<vmem>> -> memref<128xf32, #tpu.memory_space<vmem>>
      %207 = tpu.memref_slice %arg11[%c0_i32_107] : memref<2x!tpu.dma_semaphore, #tpu.memory_space<semaphore_mem>> -> memref<1x!tpu.dma_semaphore, #tpu.memory_space<semaphore_mem>>
      %208 = tpu.memref_squeeze %207 : memref<1x!tpu.dma_semaphore, #tpu.memory_space<semaphore_mem>> -> memref<!tpu.dma_semaphore, #tpu.memory_space<semaphore_mem>>
      tpu.enqueue_dma source(%204 : memref<128xf32, #tpu.memory_space<any>>) target(%206 : memref<128xf32, #tpu.memory_space<vmem>>) target_semaphore(%208 : memref<!tpu.dma_semaphore, #tpu.memory_space<semaphore_mem>>)
      %c6_i32_110 = arith.constant 6 : i32
      %c0_i32_111 = arith.constant 0 : i32
      %209 = arith.addi %c0_i32_111, %c6_i32_110 : i32
      %210 = arith.index_cast %209 : i32 to index
      %211 = memref.load %arg1[%210] : memref<8xi32, #tpu.memory_space<smem>>
      %c0_i32_112 = arith.constant 0 : i32
      %212 = arith.addi %c0_i32_112, %c6_i32_110 : i32
      %213 = arith.index_cast %212 : i32 to index
      %214 = memref.load %arg3[%213] : memref<8xi32, #tpu.memory_space<smem>>
      %c0_i32_113 = arith.constant 0 : i32
      %c0_i32_114 = arith.constant 0 : i32
      %c0_i32_115 = arith.constant 0 : i32
      %215 = tpu.memref_slice %arg4[%211, %c0_i32_115] : memref<64x128xf32, #tpu.memory_space<any>> -> memref<1x128xf32, #tpu.memory_space<any>>
      %216 = tpu.memref_squeeze %215 : memref<1x128xf32, #tpu.memory_space<any>> -> memref<128xf32, #tpu.memory_space<any>>
      %c0_i32_116 = arith.constant 0 : i32
      %217 = tpu.memref_slice %arg7[%c0_i32_113, %c6_i32_110, %c0_i32_116] : memref<2x8x128xf32, #tpu.memory_space<vmem>> -> memref<1x1x128xf32, #tpu.memory_space<vmem>>
      %218 = tpu.memref_squeeze %217 : memref<1x1x128xf32, #tpu.memory_space<vmem>> -> memref<128xf32, #tpu.memory_space<vmem>>
      %219 = tpu.memref_slice %arg10[%c0_i32_114] : memref<2x!tpu.dma_semaphore, #tpu.memory_space<semaphore_mem>> -> memref<1x!tpu.dma_semaphore, #tpu.memory_space<semaphore_mem>>
      %220 = tpu.memref_squeeze %219 : memref<1x!tpu.dma_semaphore, #tpu.memory_space<semaphore_mem>> -> memref<!tpu.dma_semaphore, #tpu.memory_space<semaphore_mem>>
      tpu.enqueue_dma source(%216 : memref<128xf32, #tpu.memory_space<any>>) target(%218 : memref<128xf32, #tpu.memory_space<vmem>>) target_semaphore(%220 : memref<!tpu.dma_semaphore, #tpu.memory_space<semaphore_mem>>)
      %c0_i32_117 = arith.constant 0 : i32
      %c0_i32_118 = arith.constant 0 : i32
      %c0_i32_119 = arith.constant 0 : i32
      %221 = tpu.memref_slice %arg4[%214, %c0_i32_119] : memref<64x128xf32, #tpu.memory_space<any>> -> memref<1x128xf32, #tpu.memory_space<any>>
      %222 = tpu.memref_squeeze %221 : memref<1x128xf32, #tpu.memory_space<any>> -> memref<128xf32, #tpu.memory_space<any>>
      %c0_i32_120 = arith.constant 0 : i32
      %223 = tpu.memref_slice %arg8[%c0_i32_117, %c6_i32_110, %c0_i32_120] : memref<2x8x128xf32, #tpu.memory_space<vmem>> -> memref<1x1x128xf32, #tpu.memory_space<vmem>>
      %224 = tpu.memref_squeeze %223 : memref<1x1x128xf32, #tpu.memory_space<vmem>> -> memref<128xf32, #tpu.memory_space<vmem>>
      %225 = tpu.memref_slice %arg11[%c0_i32_118] : memref<2x!tpu.dma_semaphore, #tpu.memory_space<semaphore_mem>> -> memref<1x!tpu.dma_semaphore, #tpu.memory_space<semaphore_mem>>
      %226 = tpu.memref_squeeze %225 : memref<1x!tpu.dma_semaphore, #tpu.memory_space<semaphore_mem>> -> memref<!tpu.dma_semaphore, #tpu.memory_space<semaphore_mem>>
      tpu.enqueue_dma source(%222 : memref<128xf32, #tpu.memory_space<any>>) target(%224 : memref<128xf32, #tpu.memory_space<vmem>>) target_semaphore(%226 : memref<!tpu.dma_semaphore, #tpu.memory_space<semaphore_mem>>)
      %c7_i32_121 = arith.constant 7 : i32
      %c0_i32_122 = arith.constant 0 : i32
      %227 = arith.addi %c0_i32_122, %c7_i32_121 : i32
      %228 = arith.index_cast %227 : i32 to index
      %229 = memref.load %arg1[%228] : memref<8xi32, #tpu.memory_space<smem>>
      %c0_i32_123 = arith.constant 0 : i32
      %230 = arith.addi %c0_i32_123, %c7_i32_121 : i32
      %231 = arith.index_cast %230 : i32 to index
      %232 = memref.load %arg3[%231] : memref<8xi32, #tpu.memory_space<smem>>
      %c0_i32_124 = arith.constant 0 : i32
      %c0_i32_125 = arith.constant 0 : i32
      %c0_i32_126 = arith.constant 0 : i32
      %233 = tpu.memref_slice %arg4[%229, %c0_i32_126] : memref<64x128xf32, #tpu.memory_space<any>> -> memref<1x128xf32, #tpu.memory_space<any>>
      %234 = tpu.memref_squeeze %233 : memref<1x128xf32, #tpu.memory_space<any>> -> memref<128xf32, #tpu.memory_space<any>>
      %c0_i32_127 = arith.constant 0 : i32
      %235 = tpu.memref_slice %arg7[%c0_i32_124, %c7_i32_121, %c0_i32_127] : memref<2x8x128xf32, #tpu.memory_space<vmem>> -> memref<1x1x128xf32, #tpu.memory_space<vmem>>
      %236 = tpu.memref_squeeze %235 : memref<1x1x128xf32, #tpu.memory_space<vmem>> -> memref<128xf32, #tpu.memory_space<vmem>>
      %237 = tpu.memref_slice %arg10[%c0_i32_125] : memref<2x!tpu.dma_semaphore, #tpu.memory_space<semaphore_mem>> -> memref<1x!tpu.dma_semaphore, #tpu.memory_space<semaphore_mem>>
      %238 = tpu.memref_squeeze %237 : memref<1x!tpu.dma_semaphore, #tpu.memory_space<semaphore_mem>> -> memref<!tpu.dma_semaphore, #tpu.memory_space<semaphore_mem>>
      tpu.enqueue_dma source(%234 : memref<128xf32, #tpu.memory_space<any>>) target(%236 : memref<128xf32, #tpu.memory_space<vmem>>) target_semaphore(%238 : memref<!tpu.dma_semaphore, #tpu.memory_space<semaphore_mem>>)
      %c0_i32_128 = arith.constant 0 : i32
      %c0_i32_129 = arith.constant 0 : i32
      %c0_i32_130 = arith.constant 0 : i32
      %239 = tpu.memref_slice %arg4[%232, %c0_i32_130] : memref<64x128xf32, #tpu.memory_space<any>> -> memref<1x128xf32, #tpu.memory_space<any>>
      %240 = tpu.memref_squeeze %239 : memref<1x128xf32, #tpu.memory_space<any>> -> memref<128xf32, #tpu.memory_space<any>>
      %c0_i32_131 = arith.constant 0 : i32
      %241 = tpu.memref_slice %arg8[%c0_i32_128, %c7_i32_121, %c0_i32_131] : memref<2x8x128xf32, #tpu.memory_space<vmem>> -> memref<1x1x128xf32, #tpu.memory_space<vmem>>
      %242 = tpu.memref_squeeze %241 : memref<1x1x128xf32, #tpu.memory_space<vmem>> -> memref<128xf32, #tpu.memory_space<vmem>>
      %243 = tpu.memref_slice %arg11[%c0_i32_129] : memref<2x!tpu.dma_semaphore, #tpu.memory_space<semaphore_mem>> -> memref<1x!tpu.dma_semaphore, #tpu.memory_space<semaphore_mem>>
      %244 = tpu.memref_squeeze %243 : memref<1x!tpu.dma_semaphore, #tpu.memory_space<semaphore_mem>> -> memref<!tpu.dma_semaphore, #tpu.memory_space<semaphore_mem>>
      tpu.enqueue_dma source(%240 : memref<128xf32, #tpu.memory_space<any>>) target(%242 : memref<128xf32, #tpu.memory_space<vmem>>) target_semaphore(%244 : memref<!tpu.dma_semaphore, #tpu.memory_space<semaphore_mem>>)
      %c8_i32_132 = arith.constant 8 : i32
    } else {
    }
    %c1_i32_5 = arith.constant 1 : i32
    %13 = arith.addi %arg0, %c1_i32_5 : i32
    %c1_i32_6 = arith.constant 1 : i32
    %14 = arith.cmpi slt, %13, %c1_i32_6 : i32
    %15 = arith.extui %14 : i1 to i32
    %c0_i32_7 = arith.constant 0 : i32
    %16 = arith.cmpi ne, %15, %c0_i32_7 : i32
    scf.if %16 {
      %c1_i32_44 = arith.constant 1 : i32
      %101 = arith.addi %arg0, %c1_i32_44 : i32
      %c1_i32_45 = arith.constant 1 : i32
      %102 = arith.addi %arg0, %c1_i32_45 : i32
      %c2_i32_46 = arith.constant 2 : i32
      %c0_i32_47 = arith.constant 0 : i32
      %103 = arith.cmpi eq, %c2_i32_46, %c0_i32_47 : i32
      %c1_i32_48 = arith.constant 1 : i32
      %104 = arith.select %103, %c1_i32_48, %c2_i32_46 : i32
      %105 = arith.remsi %102, %104 : i32
      %c0_i32_49 = arith.constant 0 : i32
      %106 = arith.cmpi ne, %105, %c0_i32_49 : i32
      %c0_i32_50 = arith.constant 0 : i32
      %107 = arith.cmpi slt, %105, %c0_i32_50 : i32
      %c0_i32_51 = arith.constant 0 : i32
      %108 = arith.cmpi slt, %104, %c0_i32_51 : i32
      %109 = arith.xori %107, %108 : i1
      %110 = arith.andi %109, %106 : i1
      %111 = arith.addi %105, %104 : i32
      %112 = arith.select %110, %111, %105 : i32
      %c8_i32_52 = arith.constant 8 : i32
      %113 = arith.muli %101, %c8_i32_52 : i32
      %c0_i32_53 = arith.constant 0 : i32
      %114 = arith.addi %113, %c0_i32_53 : i32
      %115 = arith.index_cast %114 : i32 to index
      %116 = memref.load %arg1[%115] : memref<8xi32, #tpu.memory_space<smem>>
      %117 = arith.addi %113, %c0_i32_53 : i32
      %118 = arith.index_cast %117 : i32 to index
      %119 = memref.load %arg3[%118] : memref<8xi32, #tpu.memory_space<smem>>
      %c0_i32_54 = arith.constant 0 : i32
      %120 = tpu.memref_slice %arg4[%116, %c0_i32_54] : memref<64x128xf32, #tpu.memory_space<any>> -> memref<1x128xf32, #tpu.memory_space<any>>
      %121 = tpu.memref_squeeze %120 : memref<1x128xf32, #tpu.memory_space<any>> -> memref<128xf32, #tpu.memory_space<any>>
      %c0_i32_55 = arith.constant 0 : i32
      %122 = tpu.memref_slice %arg7[%112, %c0_i32_53, %c0_i32_55] : memref<2x8x128xf32, #tpu.memory_space<vmem>> -> memref<1x1x128xf32, #tpu.memory_space<vmem>>
      %123 = tpu.memref_squeeze %122 : memref<1x1x128xf32, #tpu.memory_space<vmem>> -> memref<128xf32, #tpu.memory_space<vmem>>
      %124 = tpu.memref_slice %arg10[%112] : memref<2x!tpu.dma_semaphore, #tpu.memory_space<semaphore_mem>> -> memref<1x!tpu.dma_semaphore, #tpu.memory_space<semaphore_mem>>
      %125 = tpu.memref_squeeze %124 : memref<1x!tpu.dma_semaphore, #tpu.memory_space<semaphore_mem>> -> memref<!tpu.dma_semaphore, #tpu.memory_space<semaphore_mem>>
      tpu.enqueue_dma source(%121 : memref<128xf32, #tpu.memory_space<any>>) target(%123 : memref<128xf32, #tpu.memory_space<vmem>>) target_semaphore(%125 : memref<!tpu.dma_semaphore, #tpu.memory_space<semaphore_mem>>)
      %c0_i32_56 = arith.constant 0 : i32
      %126 = tpu.memref_slice %arg4[%119, %c0_i32_56] : memref<64x128xf32, #tpu.memory_space<any>> -> memref<1x128xf32, #tpu.memory_space<any>>
      %127 = tpu.memref_squeeze %126 : memref<1x128xf32, #tpu.memory_space<any>> -> memref<128xf32, #tpu.memory_space<any>>
      %c0_i32_57 = arith.constant 0 : i32
      %128 = tpu.memref_slice %arg8[%112, %c0_i32_53, %c0_i32_57] : memref<2x8x128xf32, #tpu.memory_space<vmem>> -> memref<1x1x128xf32, #tpu.memory_space<vmem>>
      %129 = tpu.memref_squeeze %128 : memref<1x1x128xf32, #tpu.memory_space<vmem>> -> memref<128xf32, #tpu.memory_space<vmem>>
      %130 = tpu.memref_slice %arg11[%112] : memref<2x!tpu.dma_semaphore, #tpu.memory_space<semaphore_mem>> -> memref<1x!tpu.dma_semaphore, #tpu.memory_space<semaphore_mem>>
      %131 = tpu.memref_squeeze %130 : memref<1x!tpu.dma_semaphore, #tpu.memory_space<semaphore_mem>> -> memref<!tpu.dma_semaphore, #tpu.memory_space<semaphore_mem>>
      tpu.enqueue_dma source(%127 : memref<128xf32, #tpu.memory_space<any>>) target(%129 : memref<128xf32, #tpu.memory_space<vmem>>) target_semaphore(%131 : memref<!tpu.dma_semaphore, #tpu.memory_space<semaphore_mem>>)
      %c1_i32_58 = arith.constant 1 : i32
      %132 = arith.addi %113, %c1_i32_58 : i32
      %133 = arith.index_cast %132 : i32 to index
      %134 = memref.load %arg1[%133] : memref<8xi32, #tpu.memory_space<smem>>
      %135 = arith.addi %113, %c1_i32_58 : i32
      %136 = arith.index_cast %135 : i32 to index
      %137 = memref.load %arg3[%136] : memref<8xi32, #tpu.memory_space<smem>>
      %c0_i32_59 = arith.constant 0 : i32
      %138 = tpu.memref_slice %arg4[%134, %c0_i32_59] : memref<64x128xf32, #tpu.memory_space<any>> -> memref<1x128xf32, #tpu.memory_space<any>>
      %139 = tpu.memref_squeeze %138 : memref<1x128xf32, #tpu.memory_space<any>> -> memref<128xf32, #tpu.memory_space<any>>
      %c0_i32_60 = arith.constant 0 : i32
      %140 = tpu.memref_slice %arg7[%112, %c1_i32_58, %c0_i32_60] : memref<2x8x128xf32, #tpu.memory_space<vmem>> -> memref<1x1x128xf32, #tpu.memory_space<vmem>>
      %141 = tpu.memref_squeeze %140 : memref<1x1x128xf32, #tpu.memory_space<vmem>> -> memref<128xf32, #tpu.memory_space<vmem>>
      %142 = tpu.memref_slice %arg10[%112] : memref<2x!tpu.dma_semaphore, #tpu.memory_space<semaphore_mem>> -> memref<1x!tpu.dma_semaphore, #tpu.memory_space<semaphore_mem>>
      %143 = tpu.memref_squeeze %142 : memref<1x!tpu.dma_semaphore, #tpu.memory_space<semaphore_mem>> -> memref<!tpu.dma_semaphore, #tpu.memory_space<semaphore_mem>>
      tpu.enqueue_dma source(%139 : memref<128xf32, #tpu.memory_space<any>>) target(%141 : memref<128xf32, #tpu.memory_space<vmem>>) target_semaphore(%143 : memref<!tpu.dma_semaphore, #tpu.memory_space<semaphore_mem>>)
      %c0_i32_61 = arith.constant 0 : i32
      %144 = tpu.memref_slice %arg4[%137, %c0_i32_61] : memref<64x128xf32, #tpu.memory_space<any>> -> memref<1x128xf32, #tpu.memory_space<any>>
      %145 = tpu.memref_squeeze %144 : memref<1x128xf32, #tpu.memory_space<any>> -> memref<128xf32, #tpu.memory_space<any>>
      %c0_i32_62 = arith.constant 0 : i32
      %146 = tpu.memref_slice %arg8[%112, %c1_i32_58, %c0_i32_62] : memref<2x8x128xf32, #tpu.memory_space<vmem>> -> memref<1x1x128xf32, #tpu.memory_space<vmem>>
      %147 = tpu.memref_squeeze %146 : memref<1x1x128xf32, #tpu.memory_space<vmem>> -> memref<128xf32, #tpu.memory_space<vmem>>
      %148 = tpu.memref_slice %arg11[%112] : memref<2x!tpu.dma_semaphore, #tpu.memory_space<semaphore_mem>> -> memref<1x!tpu.dma_semaphore, #tpu.memory_space<semaphore_mem>>
      %149 = tpu.memref_squeeze %148 : memref<1x!tpu.dma_semaphore, #tpu.memory_space<semaphore_mem>> -> memref<!tpu.dma_semaphore, #tpu.memory_space<semaphore_mem>>
      tpu.enqueue_dma source(%145 : memref<128xf32, #tpu.memory_space<any>>) target(%147 : memref<128xf32, #tpu.memory_space<vmem>>) target_semaphore(%149 : memref<!tpu.dma_semaphore, #tpu.memory_space<semaphore_mem>>)
      %c2_i32_63 = arith.constant 2 : i32
      %150 = arith.addi %113, %c2_i32_63 : i32
      %151 = arith.index_cast %150 : i32 to index
      %152 = memref.load %arg1[%151] : memref<8xi32, #tpu.memory_space<smem>>
      %153 = arith.addi %113, %c2_i32_63 : i32
      %154 = arith.index_cast %153 : i32 to index
      %155 = memref.load %arg3[%154] : memref<8xi32, #tpu.memory_space<smem>>
      %c0_i32_64 = arith.constant 0 : i32
      %156 = tpu.memref_slice %arg4[%152, %c0_i32_64] : memref<64x128xf32, #tpu.memory_space<any>> -> memref<1x128xf32, #tpu.memory_space<any>>
      %157 = tpu.memref_squeeze %156 : memref<1x128xf32, #tpu.memory_space<any>> -> memref<128xf32, #tpu.memory_space<any>>
      %c0_i32_65 = arith.constant 0 : i32
      %158 = tpu.memref_slice %arg7[%112, %c2_i32_63, %c0_i32_65] : memref<2x8x128xf32, #tpu.memory_space<vmem>> -> memref<1x1x128xf32, #tpu.memory_space<vmem>>
      %159 = tpu.memref_squeeze %158 : memref<1x1x128xf32, #tpu.memory_space<vmem>> -> memref<128xf32, #tpu.memory_space<vmem>>
      %160 = tpu.memref_slice %arg10[%112] : memref<2x!tpu.dma_semaphore, #tpu.memory_space<semaphore_mem>> -> memref<1x!tpu.dma_semaphore, #tpu.memory_space<semaphore_mem>>
      %161 = tpu.memref_squeeze %160 : memref<1x!tpu.dma_semaphore, #tpu.memory_space<semaphore_mem>> -> memref<!tpu.dma_semaphore, #tpu.memory_space<semaphore_mem>>
      tpu.enqueue_dma source(%157 : memref<128xf32, #tpu.memory_space<any>>) target(%159 : memref<128xf32, #tpu.memory_space<vmem>>) target_semaphore(%161 : memref<!tpu.dma_semaphore, #tpu.memory_space<semaphore_mem>>)
      %c0_i32_66 = arith.constant 0 : i32
      %162 = tpu.memref_slice %arg4[%155, %c0_i32_66] : memref<64x128xf32, #tpu.memory_space<any>> -> memref<1x128xf32, #tpu.memory_space<any>>
      %163 = tpu.memref_squeeze %162 : memref<1x128xf32, #tpu.memory_space<any>> -> memref<128xf32, #tpu.memory_space<any>>
      %c0_i32_67 = arith.constant 0 : i32
      %164 = tpu.memref_slice %arg8[%112, %c2_i32_63, %c0_i32_67] : memref<2x8x128xf32, #tpu.memory_space<vmem>> -> memref<1x1x128xf32, #tpu.memory_space<vmem>>
      %165 = tpu.memref_squeeze %164 : memref<1x1x128xf32, #tpu.memory_space<vmem>> -> memref<128xf32, #tpu.memory_space<vmem>>
      %166 = tpu.memref_slice %arg11[%112] : memref<2x!tpu.dma_semaphore, #tpu.memory_space<semaphore_mem>> -> memref<1x!tpu.dma_semaphore, #tpu.memory_space<semaphore_mem>>
      %167 = tpu.memref_squeeze %166 : memref<1x!tpu.dma_semaphore, #tpu.memory_space<semaphore_mem>> -> memref<!tpu.dma_semaphore, #tpu.memory_space<semaphore_mem>>
      tpu.enqueue_dma source(%163 : memref<128xf32, #tpu.memory_space<any>>) target(%165 : memref<128xf32, #tpu.memory_space<vmem>>) target_semaphore(%167 : memref<!tpu.dma_semaphore, #tpu.memory_space<semaphore_mem>>)
      %c3_i32_68 = arith.constant 3 : i32
      %168 = arith.addi %113, %c3_i32_68 : i32
      %169 = arith.index_cast %168 : i32 to index
      %170 = memref.load %arg1[%169] : memref<8xi32, #tpu.memory_space<smem>>
      %171 = arith.addi %113, %c3_i32_68 : i32
      %172 = arith.index_cast %171 : i32 to index
      %173 = memref.load %arg3[%172] : memref<8xi32, #tpu.memory_space<smem>>
      %c0_i32_69 = arith.constant 0 : i32
      %174 = tpu.memref_slice %arg4[%170, %c0_i32_69] : memref<64x128xf32, #tpu.memory_space<any>> -> memref<1x128xf32, #tpu.memory_space<any>>
      %175 = tpu.memref_squeeze %174 : memref<1x128xf32, #tpu.memory_space<any>> -> memref<128xf32, #tpu.memory_space<any>>
      %c0_i32_70 = arith.constant 0 : i32
      %176 = tpu.memref_slice %arg7[%112, %c3_i32_68, %c0_i32_70] : memref<2x8x128xf32, #tpu.memory_space<vmem>> -> memref<1x1x128xf32, #tpu.memory_space<vmem>>
      %177 = tpu.memref_squeeze %176 : memref<1x1x128xf32, #tpu.memory_space<vmem>> -> memref<128xf32, #tpu.memory_space<vmem>>
      %178 = tpu.memref_slice %arg10[%112] : memref<2x!tpu.dma_semaphore, #tpu.memory_space<semaphore_mem>> -> memref<1x!tpu.dma_semaphore, #tpu.memory_space<semaphore_mem>>
      %179 = tpu.memref_squeeze %178 : memref<1x!tpu.dma_semaphore, #tpu.memory_space<semaphore_mem>> -> memref<!tpu.dma_semaphore, #tpu.memory_space<semaphore_mem>>
      tpu.enqueue_dma source(%175 : memref<128xf32, #tpu.memory_space<any>>) target(%177 : memref<128xf32, #tpu.memory_space<vmem>>) target_semaphore(%179 : memref<!tpu.dma_semaphore, #tpu.memory_space<semaphore_mem>>)
      %c0_i32_71 = arith.constant 0 : i32
      %180 = tpu.memref_slice %arg4[%173, %c0_i32_71] : memref<64x128xf32, #tpu.memory_space<any>> -> memref<1x128xf32, #tpu.memory_space<any>>
      %181 = tpu.memref_squeeze %180 : memref<1x128xf32, #tpu.memory_space<any>> -> memref<128xf32, #tpu.memory_space<any>>
      %c0_i32_72 = arith.constant 0 : i32
      %182 = tpu.memref_slice %arg8[%112, %c3_i32_68, %c0_i32_72] : memref<2x8x128xf32, #tpu.memory_space<vmem>> -> memref<1x1x128xf32, #tpu.memory_space<vmem>>
      %183 = tpu.memref_squeeze %182 : memref<1x1x128xf32, #tpu.memory_space<vmem>> -> memref<128xf32, #tpu.memory_space<vmem>>
      %184 = tpu.memref_slice %arg11[%112] : memref<2x!tpu.dma_semaphore, #tpu.memory_space<semaphore_mem>> -> memref<1x!tpu.dma_semaphore, #tpu.memory_space<semaphore_mem>>
      %185 = tpu.memref_squeeze %184 : memref<1x!tpu.dma_semaphore, #tpu.memory_space<semaphore_mem>> -> memref<!tpu.dma_semaphore, #tpu.memory_space<semaphore_mem>>
      tpu.enqueue_dma source(%181 : memref<128xf32, #tpu.memory_space<any>>) target(%183 : memref<128xf32, #tpu.memory_space<vmem>>) target_semaphore(%185 : memref<!tpu.dma_semaphore, #tpu.memory_space<semaphore_mem>>)
      %c4_i32_73 = arith.constant 4 : i32
      %186 = arith.addi %113, %c4_i32_73 : i32
      %187 = arith.index_cast %186 : i32 to index
      %188 = memref.load %arg1[%187] : memref<8xi32, #tpu.memory_space<smem>>
      %189 = arith.addi %113, %c4_i32_73 : i32
      %190 = arith.index_cast %189 : i32 to index
      %191 = memref.load %arg3[%190] : memref<8xi32, #tpu.memory_space<smem>>
      %c0_i32_74 = arith.constant 0 : i32
      %192 = tpu.memref_slice %arg4[%188, %c0_i32_74] : memref<64x128xf32, #tpu.memory_space<any>> -> memref<1x128xf32, #tpu.memory_space<any>>
      %193 = tpu.memref_squeeze %192 : memref<1x128xf32, #tpu.memory_space<any>> -> memref<128xf32, #tpu.memory_space<any>>
      %c0_i32_75 = arith.constant 0 : i32
      %194 = tpu.memref_slice %arg7[%112, %c4_i32_73, %c0_i32_75] : memref<2x8x128xf32, #tpu.memory_space<vmem>> -> memref<1x1x128xf32, #tpu.memory_space<vmem>>
      %195 = tpu.memref_squeeze %194 : memref<1x1x128xf32, #tpu.memory_space<vmem>> -> memref<128xf32, #tpu.memory_space<vmem>>
      %196 = tpu.memref_slice %arg10[%112] : memref<2x!tpu.dma_semaphore, #tpu.memory_space<semaphore_mem>> -> memref<1x!tpu.dma_semaphore, #tpu.memory_space<semaphore_mem>>
      %197 = tpu.memref_squeeze %196 : memref<1x!tpu.dma_semaphore, #tpu.memory_space<semaphore_mem>> -> memref<!tpu.dma_semaphore, #tpu.memory_space<semaphore_mem>>
      tpu.enqueue_dma source(%193 : memref<128xf32, #tpu.memory_space<any>>) target(%195 : memref<128xf32, #tpu.memory_space<vmem>>) target_semaphore(%197 : memref<!tpu.dma_semaphore, #tpu.memory_space<semaphore_mem>>)
      %c0_i32_76 = arith.constant 0 : i32
      %198 = tpu.memref_slice %arg4[%191, %c0_i32_76] : memref<64x128xf32, #tpu.memory_space<any>> -> memref<1x128xf32, #tpu.memory_space<any>>
      %199 = tpu.memref_squeeze %198 : memref<1x128xf32, #tpu.memory_space<any>> -> memref<128xf32, #tpu.memory_space<any>>
      %c0_i32_77 = arith.constant 0 : i32
      %200 = tpu.memref_slice %arg8[%112, %c4_i32_73, %c0_i32_77] : memref<2x8x128xf32, #tpu.memory_space<vmem>> -> memref<1x1x128xf32, #tpu.memory_space<vmem>>
      %201 = tpu.memref_squeeze %200 : memref<1x1x128xf32, #tpu.memory_space<vmem>> -> memref<128xf32, #tpu.memory_space<vmem>>
      %202 = tpu.memref_slice %arg11[%112] : memref<2x!tpu.dma_semaphore, #tpu.memory_space<semaphore_mem>> -> memref<1x!tpu.dma_semaphore, #tpu.memory_space<semaphore_mem>>
      %203 = tpu.memref_squeeze %202 : memref<1x!tpu.dma_semaphore, #tpu.memory_space<semaphore_mem>> -> memref<!tpu.dma_semaphore, #tpu.memory_space<semaphore_mem>>
      tpu.enqueue_dma source(%199 : memref<128xf32, #tpu.memory_space<any>>) target(%201 : memref<128xf32, #tpu.memory_space<vmem>>) target_semaphore(%203 : memref<!tpu.dma_semaphore, #tpu.memory_space<semaphore_mem>>)
      %c5_i32_78 = arith.constant 5 : i32
      %204 = arith.addi %113, %c5_i32_78 : i32
      %205 = arith.index_cast %204 : i32 to index
      %206 = memref.load %arg1[%205] : memref<8xi32, #tpu.memory_space<smem>>
      %207 = arith.addi %113, %c5_i32_78 : i32
      %208 = arith.index_cast %207 : i32 to index
      %209 = memref.load %arg3[%208] : memref<8xi32, #tpu.memory_space<smem>>
      %c0_i32_79 = arith.constant 0 : i32
      %210 = tpu.memref_slice %arg4[%206, %c0_i32_79] : memref<64x128xf32, #tpu.memory_space<any>> -> memref<1x128xf32, #tpu.memory_space<any>>
      %211 = tpu.memref_squeeze %210 : memref<1x128xf32, #tpu.memory_space<any>> -> memref<128xf32, #tpu.memory_space<any>>
      %c0_i32_80 = arith.constant 0 : i32
      %212 = tpu.memref_slice %arg7[%112, %c5_i32_78, %c0_i32_80] : memref<2x8x128xf32, #tpu.memory_space<vmem>> -> memref<1x1x128xf32, #tpu.memory_space<vmem>>
      %213 = tpu.memref_squeeze %212 : memref<1x1x128xf32, #tpu.memory_space<vmem>> -> memref<128xf32, #tpu.memory_space<vmem>>
      %214 = tpu.memref_slice %arg10[%112] : memref<2x!tpu.dma_semaphore, #tpu.memory_space<semaphore_mem>> -> memref<1x!tpu.dma_semaphore, #tpu.memory_space<semaphore_mem>>
      %215 = tpu.memref_squeeze %214 : memref<1x!tpu.dma_semaphore, #tpu.memory_space<semaphore_mem>> -> memref<!tpu.dma_semaphore, #tpu.memory_space<semaphore_mem>>
      tpu.enqueue_dma source(%211 : memref<128xf32, #tpu.memory_space<any>>) target(%213 : memref<128xf32, #tpu.memory_space<vmem>>) target_semaphore(%215 : memref<!tpu.dma_semaphore, #tpu.memory_space<semaphore_mem>>)
      %c0_i32_81 = arith.constant 0 : i32
      %216 = tpu.memref_slice %arg4[%209, %c0_i32_81] : memref<64x128xf32, #tpu.memory_space<any>> -> memref<1x128xf32, #tpu.memory_space<any>>
      %217 = tpu.memref_squeeze %216 : memref<1x128xf32, #tpu.memory_space<any>> -> memref<128xf32, #tpu.memory_space<any>>
      %c0_i32_82 = arith.constant 0 : i32
      %218 = tpu.memref_slice %arg8[%112, %c5_i32_78, %c0_i32_82] : memref<2x8x128xf32, #tpu.memory_space<vmem>> -> memref<1x1x128xf32, #tpu.memory_space<vmem>>
      %219 = tpu.memref_squeeze %218 : memref<1x1x128xf32, #tpu.memory_space<vmem>> -> memref<128xf32, #tpu.memory_space<vmem>>
      %220 = tpu.memref_slice %arg11[%112] : memref<2x!tpu.dma_semaphore, #tpu.memory_space<semaphore_mem>> -> memref<1x!tpu.dma_semaphore, #tpu.memory_space<semaphore_mem>>
      %221 = tpu.memref_squeeze %220 : memref<1x!tpu.dma_semaphore, #tpu.memory_space<semaphore_mem>> -> memref<!tpu.dma_semaphore, #tpu.memory_space<semaphore_mem>>
      tpu.enqueue_dma source(%217 : memref<128xf32, #tpu.memory_space<any>>) target(%219 : memref<128xf32, #tpu.memory_space<vmem>>) target_semaphore(%221 : memref<!tpu.dma_semaphore, #tpu.memory_space<semaphore_mem>>)
      %c6_i32_83 = arith.constant 6 : i32
      %222 = arith.addi %113, %c6_i32_83 : i32
      %223 = arith.index_cast %222 : i32 to index
      %224 = memref.load %arg1[%223] : memref<8xi32, #tpu.memory_space<smem>>
      %225 = arith.addi %113, %c6_i32_83 : i32
      %226 = arith.index_cast %225 : i32 to index
      %227 = memref.load %arg3[%226] : memref<8xi32, #tpu.memory_space<smem>>
      %c0_i32_84 = arith.constant 0 : i32
      %228 = tpu.memref_slice %arg4[%224, %c0_i32_84] : memref<64x128xf32, #tpu.memory_space<any>> -> memref<1x128xf32, #tpu.memory_space<any>>
      %229 = tpu.memref_squeeze %228 : memref<1x128xf32, #tpu.memory_space<any>> -> memref<128xf32, #tpu.memory_space<any>>
      %c0_i32_85 = arith.constant 0 : i32
      %230 = tpu.memref_slice %arg7[%112, %c6_i32_83, %c0_i32_85] : memref<2x8x128xf32, #tpu.memory_space<vmem>> -> memref<1x1x128xf32, #tpu.memory_space<vmem>>
      %231 = tpu.memref_squeeze %230 : memref<1x1x128xf32, #tpu.memory_space<vmem>> -> memref<128xf32, #tpu.memory_space<vmem>>
      %232 = tpu.memref_slice %arg10[%112] : memref<2x!tpu.dma_semaphore, #tpu.memory_space<semaphore_mem>> -> memref<1x!tpu.dma_semaphore, #tpu.memory_space<semaphore_mem>>
      %233 = tpu.memref_squeeze %232 : memref<1x!tpu.dma_semaphore, #tpu.memory_space<semaphore_mem>> -> memref<!tpu.dma_semaphore, #tpu.memory_space<semaphore_mem>>
      tpu.enqueue_dma source(%229 : memref<128xf32, #tpu.memory_space<any>>) target(%231 : memref<128xf32, #tpu.memory_space<vmem>>) target_semaphore(%233 : memref<!tpu.dma_semaphore, #tpu.memory_space<semaphore_mem>>)
      %c0_i32_86 = arith.constant 0 : i32
      %234 = tpu.memref_slice %arg4[%227, %c0_i32_86] : memref<64x128xf32, #tpu.memory_space<any>> -> memref<1x128xf32, #tpu.memory_space<any>>
      %235 = tpu.memref_squeeze %234 : memref<1x128xf32, #tpu.memory_space<any>> -> memref<128xf32, #tpu.memory_space<any>>
      %c0_i32_87 = arith.constant 0 : i32
      %236 = tpu.memref_slice %arg8[%112, %c6_i32_83, %c0_i32_87] : memref<2x8x128xf32, #tpu.memory_space<vmem>> -> memref<1x1x128xf32, #tpu.memory_space<vmem>>
      %237 = tpu.memref_squeeze %236 : memref<1x1x128xf32, #tpu.memory_space<vmem>> -> memref<128xf32, #tpu.memory_space<vmem>>
      %238 = tpu.memref_slice %arg11[%112] : memref<2x!tpu.dma_semaphore, #tpu.memory_space<semaphore_mem>> -> memref<1x!tpu.dma_semaphore, #tpu.memory_space<semaphore_mem>>
      %239 = tpu.memref_squeeze %238 : memref<1x!tpu.dma_semaphore, #tpu.memory_space<semaphore_mem>> -> memref<!tpu.dma_semaphore, #tpu.memory_space<semaphore_mem>>
      tpu.enqueue_dma source(%235 : memref<128xf32, #tpu.memory_space<any>>) target(%237 : memref<128xf32, #tpu.memory_space<vmem>>) target_semaphore(%239 : memref<!tpu.dma_semaphore, #tpu.memory_space<semaphore_mem>>)
      %c7_i32_88 = arith.constant 7 : i32
      %240 = arith.addi %113, %c7_i32_88 : i32
      %241 = arith.index_cast %240 : i32 to index
      %242 = memref.load %arg1[%241] : memref<8xi32, #tpu.memory_space<smem>>
      %243 = arith.addi %113, %c7_i32_88 : i32
      %244 = arith.index_cast %243 : i32 to index
      %245 = memref.load %arg3[%244] : memref<8xi32, #tpu.memory_space<smem>>
      %c0_i32_89 = arith.constant 0 : i32
      %246 = tpu.memref_slice %arg4[%242, %c0_i32_89] : memref<64x128xf32, #tpu.memory_space<any>> -> memref<1x128xf32, #tpu.memory_space<any>>
      %247 = tpu.memref_squeeze %246 : memref<1x128xf32, #tpu.memory_space<any>> -> memref<128xf32, #tpu.memory_space<any>>
      %c0_i32_90 = arith.constant 0 : i32
      %248 = tpu.memref_slice %arg7[%112, %c7_i32_88, %c0_i32_90] : memref<2x8x128xf32, #tpu.memory_space<vmem>> -> memref<1x1x128xf32, #tpu.memory_space<vmem>>
      %249 = tpu.memref_squeeze %248 : memref<1x1x128xf32, #tpu.memory_space<vmem>> -> memref<128xf32, #tpu.memory_space<vmem>>
      %250 = tpu.memref_slice %arg10[%112] : memref<2x!tpu.dma_semaphore, #tpu.memory_space<semaphore_mem>> -> memref<1x!tpu.dma_semaphore, #tpu.memory_space<semaphore_mem>>
      %251 = tpu.memref_squeeze %250 : memref<1x!tpu.dma_semaphore, #tpu.memory_space<semaphore_mem>> -> memref<!tpu.dma_semaphore, #tpu.memory_space<semaphore_mem>>
      tpu.enqueue_dma source(%247 : memref<128xf32, #tpu.memory_space<any>>) target(%249 : memref<128xf32, #tpu.memory_space<vmem>>) target_semaphore(%251 : memref<!tpu.dma_semaphore, #tpu.memory_space<semaphore_mem>>)
      %c0_i32_91 = arith.constant 0 : i32
      %252 = tpu.memref_slice %arg4[%245, %c0_i32_91] : memref<64x128xf32, #tpu.memory_space<any>> -> memref<1x128xf32, #tpu.memory_space<any>>
      %253 = tpu.memref_squeeze %252 : memref<1x128xf32, #tpu.memory_space<any>> -> memref<128xf32, #tpu.memory_space<any>>
      %c0_i32_92 = arith.constant 0 : i32
      %254 = tpu.memref_slice %arg8[%112, %c7_i32_88, %c0_i32_92] : memref<2x8x128xf32, #tpu.memory_space<vmem>> -> memref<1x1x128xf32, #tpu.memory_space<vmem>>
      %255 = tpu.memref_squeeze %254 : memref<1x1x128xf32, #tpu.memory_space<vmem>> -> memref<128xf32, #tpu.memory_space<vmem>>
      %256 = tpu.memref_slice %arg11[%112] : memref<2x!tpu.dma_semaphore, #tpu.memory_space<semaphore_mem>> -> memref<1x!tpu.dma_semaphore, #tpu.memory_space<semaphore_mem>>
      %257 = tpu.memref_squeeze %256 : memref<1x!tpu.dma_semaphore, #tpu.memory_space<semaphore_mem>> -> memref<!tpu.dma_semaphore, #tpu.memory_space<semaphore_mem>>
      tpu.enqueue_dma source(%253 : memref<128xf32, #tpu.memory_space<any>>) target(%255 : memref<128xf32, #tpu.memory_space<vmem>>) target_semaphore(%257 : memref<!tpu.dma_semaphore, #tpu.memory_space<semaphore_mem>>)
      %c8_i32_93 = arith.constant 8 : i32
    } else {
    }
    %c8_i32 = arith.constant 8 : i32
    %17 = arith.muli %arg0, %c8_i32 : i32
    %c0_i32_8 = arith.constant 0 : i32
    %18 = arith.addi %17, %c0_i32_8 : i32
    %19 = arith.index_cast %18 : i32 to index
    %20 = memref.load %arg2[%19] : memref<8xi32, #tpu.memory_space<smem>>
    %21 = arith.index_cast %20 : i32 to index
    %c0 = arith.constant 0 : index
    %22 = vector.load %arg5[%21, %c0] : memref<16x128xf32, #tpu.memory_space<vmem>>, vector<1x128xf32>
    %23 = arith.index_cast %c0_i32_8 : i32 to index
    %c0_9 = arith.constant 0 : index
    %24 = vector.load %arg9[%23, %c0_9] : memref<8x128xf32, #tpu.memory_space<vmem>>, vector<1x128xf32>
    tpu.vector_store %arg9[%23, %c0_9], %22 {strides = array<i32>} : memref<8x128xf32, #tpu.memory_space<vmem>>, vector<1x128xf32>,
    %c1_i32_10 = arith.constant 1 : i32
    %25 = arith.addi %17, %c1_i32_10 : i32
    %26 = arith.index_cast %25 : i32 to index
    %27 = memref.load %arg2[%26] : memref<8xi32, #tpu.memory_space<smem>>
    %28 = arith.index_cast %27 : i32 to index
    %c0_11 = arith.constant 0 : index
    %29 = vector.load %arg5[%28, %c0_11] : memref<16x128xf32, #tpu.memory_space<vmem>>, vector<1x128xf32>
    %30 = arith.index_cast %c1_i32_10 : i32 to index
    %c0_12 = arith.constant 0 : index
    %31 = vector.load %arg9[%30, %c0_12] : memref<8x128xf32, #tpu.memory_space<vmem>>, vector<1x128xf32>
    tpu.vector_store %arg9[%30, %c0_12], %29 {strides = array<i32>} : memref<8x128xf32, #tpu.memory_space<vmem>>, vector<1x128xf32>,
    %c2_i32_13 = arith.constant 2 : i32
    %32 = arith.addi %17, %c2_i32_13 : i32
    %33 = arith.index_cast %32 : i32 to index
    %34 = memref.load %arg2[%33] : memref<8xi32, #tpu.memory_space<smem>>
    %35 = arith.index_cast %34 : i32 to index
    %c0_14 = arith.constant 0 : index
    %36 = vector.load %arg5[%35, %c0_14] : memref<16x128xf32, #tpu.memory_space<vmem>>, vector<1x128xf32>
    %37 = arith.index_cast %c2_i32_13 : i32 to index
    %c0_15 = arith.constant 0 : index
    %38 = vector.load %arg9[%37, %c0_15] : memref<8x128xf32, #tpu.memory_space<vmem>>, vector<1x128xf32>
    tpu.vector_store %arg9[%37, %c0_15], %36 {strides = array<i32>} : memref<8x128xf32, #tpu.memory_space<vmem>>, vector<1x128xf32>,
    %c3_i32 = arith.constant 3 : i32
    %39 = arith.addi %17, %c3_i32 : i32
    %40 = arith.index_cast %39 : i32 to index
    %41 = memref.load %arg2[%40] : memref<8xi32, #tpu.memory_space<smem>>
    %42 = arith.index_cast %41 : i32 to index
    %c0_16 = arith.constant 0 : index
    %43 = vector.load %arg5[%42, %c0_16] : memref<16x128xf32, #tpu.memory_space<vmem>>, vector<1x128xf32>
    %44 = arith.index_cast %c3_i32 : i32 to index
    %c0_17 = arith.constant 0 : index
    %45 = vector.load %arg9[%44, %c0_17] : memref<8x128xf32, #tpu.memory_space<vmem>>, vector<1x128xf32>
    tpu.vector_store %arg9[%44, %c0_17], %43 {strides = array<i32>} : memref<8x128xf32, #tpu.memory_space<vmem>>, vector<1x128xf32>,
    %c4_i32 = arith.constant 4 : i32
    %46 = arith.addi %17, %c4_i32 : i32
    %47 = arith.index_cast %46 : i32 to index
    %48 = memref.load %arg2[%47] : memref<8xi32, #tpu.memory_space<smem>>
    %49 = arith.index_cast %48 : i32 to index
    %c0_18 = arith.constant 0 : index
    %50 = vector.load %arg5[%49, %c0_18] : memref<16x128xf32, #tpu.memory_space<vmem>>, vector<1x128xf32>
    %51 = arith.index_cast %c4_i32 : i32 to index
    %c0_19 = arith.constant 0 : index
    %52 = vector.load %arg9[%51, %c0_19] : memref<8x128xf32, #tpu.memory_space<vmem>>, vector<1x128xf32>
    tpu.vector_store %arg9[%51, %c0_19], %50 {strides = array<i32>} : memref<8x128xf32, #tpu.memory_space<vmem>>, vector<1x128xf32>,
    %c5_i32 = arith.constant 5 : i32
    %53 = arith.addi %17, %c5_i32 : i32
    %54 = arith.index_cast %53 : i32 to index
    %55 = memref.load %arg2[%54] : memref<8xi32, #tpu.memory_space<smem>>
    %56 = arith.index_cast %55 : i32 to index
    %c0_20 = arith.constant 0 : index
    %57 = vector.load %arg5[%56, %c0_20] : memref<16x128xf32, #tpu.memory_space<vmem>>, vector<1x128xf32>
    %58 = arith.index_cast %c5_i32 : i32 to index
    %c0_21 = arith.constant 0 : index
    %59 = vector.load %arg9[%58, %c0_21] : memref<8x128xf32, #tpu.memory_space<vmem>>, vector<1x128xf32>
    tpu.vector_store %arg9[%58, %c0_21], %57 {strides = array<i32>} : memref<8x128xf32, #tpu.memory_space<vmem>>, vector<1x128xf32>,
    %c6_i32 = arith.constant 6 : i32
    %60 = arith.addi %17, %c6_i32 : i32
    %61 = arith.index_cast %60 : i32 to index
    %62 = memref.load %arg2[%61] : memref<8xi32, #tpu.memory_space<smem>>
    %63 = arith.index_cast %62 : i32 to index
    %c0_22 = arith.constant 0 : index
    %64 = vector.load %arg5[%63, %c0_22] : memref<16x128xf32, #tpu.memory_space<vmem>>, vector<1x128xf32>
    %65 = arith.index_cast %c6_i32 : i32 to index
    %c0_23 = arith.constant 0 : index
    %66 = vector.load %arg9[%65, %c0_23] : memref<8x128xf32, #tpu.memory_space<vmem>>, vector<1x128xf32>
    tpu.vector_store %arg9[%65, %c0_23], %64 {strides = array<i32>} : memref<8x128xf32, #tpu.memory_space<vmem>>, vector<1x128xf32>,
    %c7_i32 = arith.constant 7 : i32
    %67 = arith.addi %17, %c7_i32 : i32
    %68 = arith.index_cast %67 : i32 to index
    %69 = memref.load %arg2[%68] : memref<8xi32, #tpu.memory_space<smem>>
    %70 = arith.index_cast %69 : i32 to index
    %c0_24 = arith.constant 0 : index
    %71 = vector.load %arg5[%70, %c0_24] : memref<16x128xf32, #tpu.memory_space<vmem>>, vector<1x128xf32>
    %72 = arith.index_cast %c7_i32 : i32 to index
    %c0_25 = arith.constant 0 : index
    %73 = vector.load %arg9[%72, %c0_25] : memref<8x128xf32, #tpu.memory_space<vmem>>, vector<1x128xf32>
    tpu.vector_store %arg9[%72, %c0_25], %71 {strides = array<i32>} : memref<8x128xf32, #tpu.memory_space<vmem>>, vector<1x128xf32>,
    %c8_i32_26 = arith.constant 8 : i32
    %c0_i32_27 = arith.constant 0 : i32
    %c0_i32_28 = arith.constant 0 : i32
    %74 = tpu.memref_slice %arg7[%9, %c0_i32_27, %c0_i32_28] : memref<2x8x128xf32, #tpu.memory_space<vmem>> -> memref<1x8x128xf32, #tpu.memory_space<vmem>>
    %75 = tpu.memref_squeeze %74 : memref<1x8x128xf32, #tpu.memory_space<vmem>> -> memref<8x128xf32, #tpu.memory_space<vmem>>
    %c0_i32_29 = arith.constant 0 : i32
    %c0_i32_30 = arith.constant 0 : i32
    %76 = tpu.memref_slice %arg7[%9, %c0_i32_29, %c0_i32_30] : memref<2x8x128xf32, #tpu.memory_space<vmem>> -> memref<1x8x128xf32, #tpu.memory_space<vmem>>
    %77 = tpu.memref_squeeze %76 : memref<1x8x128xf32, #tpu.memory_space<vmem>> -> memref<8x128xf32, #tpu.memory_space<vmem>>
    %78 = tpu.memref_slice %arg10[%9] : memref<2x!tpu.dma_semaphore, #tpu.memory_space<semaphore_mem>> -> memref<1x!tpu.dma_semaphore, #tpu.memory_space<semaphore_mem>>
    %79 = tpu.memref_squeeze %78 : memref<1x!tpu.dma_semaphore, #tpu.memory_space<semaphore_mem>> -> memref<!tpu.dma_semaphore, #tpu.memory_space<semaphore_mem>>
    tpu.wait_dma2 semaphore(%79 : memref<!tpu.dma_semaphore, #tpu.memory_space<semaphore_mem>>) src(%75 : memref<8x128xf32, #tpu.memory_space<vmem>>) dst(%77 : memref<8x128xf32, #tpu.memory_space<vmem>>)
    %c0_i32_31 = arith.constant 0 : i32
    %c0_i32_32 = arith.constant 0 : i32
    %80 = tpu.memref_slice %arg8[%9, %c0_i32_31, %c0_i32_32] : memref<2x8x128xf32, #tpu.memory_space<vmem>> -> memref<1x8x128xf32, #tpu.memory_space<vmem>>
    %81 = tpu.memref_squeeze %80 : memref<1x8x128xf32, #tpu.memory_space<vmem>> -> memref<8x128xf32, #tpu.memory_space<vmem>>
    %c0_i32_33 = arith.constant 0 : i32
    %c0_i32_34 = arith.constant 0 : i32
    %82 = tpu.memref_slice %arg8[%9, %c0_i32_33, %c0_i32_34] : memref<2x8x128xf32, #tpu.memory_space<vmem>> -> memref<1x8x128xf32, #tpu.memory_space<vmem>>
    %83 = tpu.memref_squeeze %82 : memref<1x8x128xf32, #tpu.memory_space<vmem>> -> memref<8x128xf32, #tpu.memory_space<vmem>>
    %84 = tpu.memref_slice %arg11[%9] : memref<2x!tpu.dma_semaphore, #tpu.memory_space<semaphore_mem>> -> memref<1x!tpu.dma_semaphore, #tpu.memory_space<semaphore_mem>>
    %85 = tpu.memref_squeeze %84 : memref<1x!tpu.dma_semaphore, #tpu.memory_space<semaphore_mem>> -> memref<!tpu.dma_semaphore, #tpu.memory_space<semaphore_mem>>
    tpu.wait_dma2 semaphore(%85 : memref<!tpu.dma_semaphore, #tpu.memory_space<semaphore_mem>>) src(%81 : memref<8x128xf32, #tpu.memory_space<vmem>>) dst(%83 : memref<8x128xf32, #tpu.memory_space<vmem>>)
    %86 = arith.index_cast %9 : i32 to index
    %c0_35 = arith.constant 0 : index
    %c0_36 = arith.constant 0 : index
    %87 = vector.load %arg7[%86, %c0_35, %c0_36] : memref<2x8x128xf32, #tpu.memory_space<vmem>>, vector<1x8x128xf32>
    %88 = vector.shape_cast %87 : vector<1x8x128xf32> to vector<8x128xf32>
    %c0_37 = arith.constant 0 : index
    %c0_38 = arith.constant 0 : index
    %89 = vector.load %arg9[%c0_37, %c0_38] : memref<8x128xf32, #tpu.memory_space<vmem>>, vector<8x128xf32>
    %90 = arith.addf %88, %89 : vector<8x128xf32>
    %91 = arith.index_cast %9 : i32 to index
    %c0_39 = arith.constant 0 : index
    %c0_40 = arith.constant 0 : index
    %92 = vector.load %arg8[%91, %c0_39, %c0_40] : memref<2x8x128xf32, #tpu.memory_space<vmem>>, vector<1x8x128xf32>
    %93 = vector.shape_cast %92 : vector<1x8x128xf32> to vector<8x128xf32>
    %94 = arith.subf %90, %93 : vector<8x128xf32>
    %95 = math.absf %94 : vector<8x128xf32>
    %cst = arith.constant dense<0.000000e+00> : vector<8xf32>
    %96 = vector.multi_reduction <add>, %95, %cst [1] : vector<8x128xf32> to vector<8xf32>
    %cst_41 = arith.constant 1.200000e+01 : f32
    %97 = vector.broadcast %cst_41 : f32 to vector<8xf32>
    %98 = arith.subf %97, %96 : vector<8xf32>
    %99 = vector.shape_cast %98 : vector<8xf32> to vector<1x8xf32>
    %c0_42 = arith.constant 0 : index
    %c0_43 = arith.constant 0 : index
    %100 = vector.load %arg6[%c0_42, %c0_43] : memref<1x8xf32, #tpu.memory_space<vmem>>, vector<1x8xf32>
    tpu.vector_store %arg6[%c0_42, %c0_43], %99 {strides = array<i32>} : memref<1x8xf32, #tpu.memory_space<vmem>>, vector<1x8xf32>,
    return
  }
  func.func @transform_1(%arg0: i32, %arg1: memref<8xi32, #tpu.memory_space<smem>>, %arg2: memref<8xi32, #tpu.memory_space<smem>>, %arg3: memref<8xi32, #tpu.memory_space<smem>>) -> (i32, i32) {
    %c0_i32 = arith.constant 0 : i32
    %c0_i32_0 = arith.constant 0 : i32
    %c0_i32_1 = arith.constant 0 : i32
    return %c0_i32, %c0_i32_0 : i32, i32
  }
  func.func @transform_2(%arg0: i32, %arg1: memref<8xi32, #tpu.memory_space<smem>>, %arg2: memref<8xi32, #tpu.memory_space<smem>>, %arg3: memref<8xi32, #tpu.memory_space<smem>>) -> (i32, i32) {
    %c0_i32 = arith.constant 0 : i32
    %c0_i32_0 = arith.constant 0 : i32
    return %c0_i32, %arg0 : i32, i32
  }
}

</mosaic_0001>

<llo_original>
// kernel: tpu_custom_call.1
$region0: #{tpu_custom_call.1}
  #allocation0 [shape = 'u32[]', space=smem, size = 0x4, offset = 0x4, fixed_abs, tag = 'smem constant byte address 0x4 - core index']
  #allocation1 [shape = 'u32[144,128]{1,0:T(1,128)}', space=vmem, size = 0x12000, scoped, tag = 'internal scratch']
  #allocation2 [shape = 'f32[2,8,128]{2,1,0:T(8,128)}', space=vmem, size = 0x2000, scoped, tag = 'scratch operand']
  #allocation3 [shape = 'f32[2,8,128]{2,1,0:T(8,128)}', space=vmem, size = 0x2000, scoped, tag = 'scratch operand']
  #allocation4 [shape = 'f32[8,128]{1,0:T(8,128)}', space=vmem, size = 0x1000, scoped, tag = 'scratch operand']
  #allocation5 [shape = 's32[2]{0}', space=sflag, size = 0x8, scoped, tag = 'scratch operand']
  #allocation6 [shape = 's32[2]{0}', space=sflag, size = 0x8, scoped, tag = 'scratch operand']
  #allocation7 [shape = 's32[1]{0}', space=sflag, size = 0x4, scoped, tag = 'scoped memory for tpu_custom_call.1']
  #allocation8 [shape = 'u8[512]{0}', space=smem, size = 0x200, scoped, tag = 'prefetched SMEM operand 0']
  #allocation9 [shape = 'u8[512]{0}', space=smem, size = 0x200, scoped, tag = 'prefetched SMEM operand 1']
  #allocation10 [shape = 'u8[512]{0}', space=smem, size = 0x200, scoped, tag = 'prefetched SMEM operand 2']
  #allocation15 [shape = 's32[]', space=sflag, size = 0x4, offset = 0, fixed_abs, tag = 'sflag constant byte address 0x0 - dummy sync flag']
  #allocation16 [shape = 's32[]', space=sflag, size = 0x4, offset = 0, fixed_abs, tag = 'sflag constant byte address 0x0 - dummy sync flag']
  #allocation17 [shape = 'u32[]', space=smem, size = 0x4, offset = 0x44, fixed_abs, tag = 'smem constant byte address 0x44 - assertion arg 0']
  #allocation18 [shape = 'u32[]', space=smem, size = 0x4, offset = 0x48, fixed_abs, tag = 'smem constant byte address 0x48 - assertion arg 1']
  #allocation19 [shape = 's32[]', space=sflag, size = 0x4, offset = 0, fixed_abs, tag = 'sflag constant byte address 0x0 - dummy sync flag']
  #allocation20 [shape = 's32[]', space=sflag, size = 0x4, offset = 0, fixed_abs, tag = 'sflag constant byte address 0x0 - dummy sync flag']
  #allocation21 [shape = 's32[]', space=sflag, size = 0x4, offset = 0, fixed_abs, tag = 'sflag constant byte address 0x0 - dummy sync flag']
  #allocation22 [shape = 's32[]', space=sflag, size = 0x4, offset = 0, fixed_abs, tag = 'sflag constant byte address 0x0 - dummy sync flag']
  #allocation23 [shape = 's32[]', space=sflag, size = 0x4, offset = 0, fixed_abs, tag = 'sflag constant byte address 0x0 - dummy sync flag']
  #allocation24 [shape = 's32[]', space=sflag, size = 0x4, offset = 0, fixed_abs, tag = 'sflag constant byte address 0x0 - dummy sync flag']
  #allocation25 [shape = 's32[]', space=sflag, size = 0x4, offset = 0, fixed_abs, tag = 'sflag constant byte address 0x0 - dummy sync flag']
  #allocation26 [shape = 's32[]', space=sflag, size = 0x4, offset = 0, fixed_abs, tag = 'sflag constant byte address 0x0 - dummy sync flag']
  #allocation27 [shape = 's32[]', space=sflag, size = 0x4, offset = 0, fixed_abs, tag = 'sflag constant byte address 0x0 - dummy sync flag']
  #allocation28 [shape = 's32[]', space=sflag, size = 0x4, offset = 0, fixed_abs, tag = 'sflag constant byte address 0x0 - dummy sync flag']
  #allocation29 [shape = 's32[]', space=sflag, size = 0x4, offset = 0, fixed_abs, tag = 'sflag constant byte address 0x0 - dummy sync flag']
  #allocation30 [shape = 's32[]', space=sflag, size = 0x4, offset = 0, fixed_abs, tag = 'sflag constant byte address 0x0 - dummy sync flag']
  #allocation31 [shape = 's32[]', space=sflag, size = 0x4, offset = 0, fixed_abs, tag = 'sflag constant byte address 0x0 - dummy sync flag']
  #allocation32 [shape = 's32[]', space=sflag, size = 0x4, offset = 0, fixed_abs, tag = 'sflag constant byte address 0x0 - dummy sync flag']
  #allocation33 [shape = 's32[]', space=sflag, size = 0x4, offset = 0, fixed_abs, tag = 'sflag constant byte address 0x0 - dummy sync flag']
  #allocation34 [shape = 's32[]', space=sflag, size = 0x4, offset = 0, fixed_abs, tag = 'sflag constant byte address 0x0 - dummy sync flag']
  #allocation35 [shape = 's32[]', space=sflag, size = 0x4, offset = 0, fixed_abs, tag = 'sflag constant byte address 0x0 - dummy sync flag']
  #allocation36 [shape = 's32[]', space=sflag, size = 0x4, offset = 0, fixed_abs, tag = 'sflag constant byte address 0x0 - dummy sync flag']
  #allocation37 [shape = 's32[]', space=sflag, size = 0x4, offset = 0, fixed_abs, tag = 'sflag constant byte address 0x0 - dummy sync flag']
  #allocation38 [shape = 's32[]', space=sflag, size = 0x4, offset = 0, fixed_abs, tag = 'sflag constant byte address 0x0 - dummy sync flag']
  #allocation39 [shape = 's32[]', space=sflag, size = 0x4, offset = 0, fixed_abs, tag = 'sflag constant byte address 0x0 - dummy sync flag']
  #allocation40 [shape = 's32[]', space=sflag, size = 0x4, offset = 0, fixed_abs, tag = 'sflag constant byte address 0x0 - dummy sync flag']
  #allocation41 [shape = 's32[]', space=sflag, size = 0x4, offset = 0, fixed_abs, tag = 'sflag constant byte address 0x0 - dummy sync flag']
  #allocation42 [shape = 's32[]', space=sflag, size = 0x4, offset = 0, fixed_abs, tag = 'sflag constant byte address 0x0 - dummy sync flag']
  #allocation43 [shape = 's32[]', space=sflag, size = 0x4, offset = 0, fixed_abs, tag = 'sflag constant byte address 0x0 - dummy sync flag']
  #allocation44 [shape = 's32[]', space=sflag, size = 0x4, offset = 0, fixed_abs, tag = 'sflag constant byte address 0x0 - dummy sync flag']
  #allocation45 [shape = 's32[]', space=sflag, size = 0x4, offset = 0, fixed_abs, tag = 'sflag constant byte address 0x0 - dummy sync flag']
  #allocation46 [shape = 's32[]', space=sflag, size = 0x4, offset = 0, fixed_abs, tag = 'sflag constant byte address 0x0 - dummy sync flag']
  #allocation47 [shape = 's32[]', space=sflag, size = 0x4, offset = 0, fixed_abs, tag = 'sflag constant byte address 0x0 - dummy sync flag']
  #allocation48 [shape = 's32[]', space=sflag, size = 0x4, offset = 0, fixed_abs, tag = 'sflag constant byte address 0x0 - dummy sync flag']
  #allocation49 [shape = 's32[]', space=sflag, size = 0x4, offset = 0, fixed_abs, tag = 'sflag constant byte address 0x0 - dummy sync flag']
  #allocation50 [shape = 's32[]', space=sflag, size = 0x4, offset = 0, fixed_abs, tag = 'sflag constant byte address 0x0 - dummy sync flag']
  #allocation51 [shape = 's32[]', space=sflag, size = 0x4, offset = 0, fixed_abs, tag = 'sflag constant byte address 0x0 - dummy sync flag']
  #allocation52 [shape = 's32[]', space=sflag, size = 0x4, offset = 0, fixed_abs, tag = 'sflag constant byte address 0x0 - dummy sync flag']
  #allocation53 [shape = 's32[]', space=sflag, size = 0x4, offset = 0, fixed_abs, tag = 'sflag constant byte address 0x0 - dummy sync flag']
  #allocation54 [shape = 's32[]', space=sflag, size = 0x4, offset = 0, fixed_abs, tag = 'sflag constant byte address 0x0 - dummy sync flag']
  #allocation55 [shape = 's32[]', space=sflag, size = 0x4, offset = 0, fixed_abs, tag = 'sflag constant byte address 0x0 - dummy sync flag']
  #allocation56 [shape = 's32[]', space=sflag, size = 0x4, offset = 0, fixed_abs, tag = 'sflag constant byte address 0x0 - dummy sync flag']
  #allocation57 [shape = 's32[]', space=sflag, size = 0x4, offset = 0, fixed_abs, tag = 'sflag constant byte address 0x0 - dummy sync flag']
  #allocation58 [shape = 's32[]', space=sflag, size = 0x4, offset = 0, fixed_abs, tag = 'sflag constant byte address 0x0 - dummy sync flag']
  #allocation59 [shape = 's32[]', space=sflag, size = 0x4, offset = 0, fixed_abs, tag = 'sflag constant byte address 0x0 - dummy sync flag']
  #allocation60 [shape = 's32[]', space=sflag, size = 0x4, offset = 0, fixed_abs, tag = 'sflag constant byte address 0x0 - dummy sync flag']
  #allocation61 [shape = 's32[]', space=sflag, size = 0x4, offset = 0, fixed_abs, tag = 'sflag constant byte address 0x0 - dummy sync flag']
  #allocation62 [shape = 's32[]', space=sflag, size = 0x4, offset = 0, fixed_abs, tag = 'sflag constant byte address 0x0 - dummy sync flag']
  #allocation63 [shape = 's32[]', space=sflag, size = 0x4, offset = 0, fixed_abs, tag = 'sflag constant byte address 0x0 - dummy sync flag']
  #allocation64 [shape = 's32[]', space=sflag, size = 0x4, offset = 0, fixed_abs, tag = 'sflag constant byte address 0x0 - dummy sync flag']
  #allocation65 [shape = 's32[]', space=sflag, size = 0x4, offset = 0, fixed_abs, tag = 'sflag constant byte address 0x0 - dummy sync flag']
  #allocation66 [shape = 's32[]', space=sflag, size = 0x4, offset = 0, fixed_abs, tag = 'sflag constant byte address 0x0 - dummy sync flag']
  #allocation67 [shape = 's32[]', space=sflag, size = 0x4, offset = 0, fixed_abs, tag = 'sflag constant byte address 0x0 - dummy sync flag']
  #allocation68 [shape = 's32[]', space=sflag, size = 0x4, offset = 0, fixed_abs, tag = 'sflag constant byte address 0x0 - dummy sync flag']
  #allocation69 [shape = 's32[]', space=sflag, size = 0x4, offset = 0, fixed_abs, tag = 'sflag constant byte address 0x0 - dummy sync flag']
  #allocation70 [shape = 's32[]', space=sflag, size = 0x4, offset = 0, fixed_abs, tag = 'sflag constant byte address 0x0 - dummy sync flag']
  #allocation71 [shape = 's32[]', space=sflag, size = 0x4, offset = 0, fixed_abs, tag = 'sflag constant byte address 0x0 - dummy sync flag']
  #allocation72 [shape = 's32[]', space=sflag, size = 0x4, offset = 0, fixed_abs, tag = 'sflag constant byte address 0x0 - dummy sync flag']
  #allocation73 [shape = 's32[]', space=sflag, size = 0x4, offset = 0, fixed_abs, tag = 'sflag constant byte address 0x0 - dummy sync flag']
  #allocation74 [shape = 's32[]', space=sflag, size = 0x4, offset = 0, fixed_abs, tag = 'sflag constant byte address 0x0 - dummy sync flag']
  #allocation75 [shape = 's32[]', space=sflag, size = 0x4, offset = 0, fixed_abs, tag = 'sflag constant byte address 0x0 - dummy sync flag']
  #allocation76 [shape = 's32[]', space=sflag, size = 0x4, offset = 0, fixed_abs, tag = 'sflag constant byte address 0x0 - dummy sync flag']
  #allocation77 [shape = 's32[]', space=sflag, size = 0x4, offset = 0, fixed_abs, tag = 'sflag constant byte address 0x0 - dummy sync flag']
  #allocation78 [shape = 's32[]', space=sflag, size = 0x4, offset = 0, fixed_abs, tag = 'sflag constant byte address 0x0 - dummy sync flag']
  #allocation79 [shape = 's32[]', space=sflag, size = 0x4, offset = 0, fixed_abs, tag = 'sflag constant byte address 0x0 - dummy sync flag']
  #allocation80 [shape = 's32[]', space=sflag, size = 0x4, offset = 0, fixed_abs, tag = 'sflag constant byte address 0x0 - dummy sync flag']
  %s0 = inlined_call_operand.hbm [shape: s32[8], index: 0, kind: input, shape index: {}]
  %s1 = inlined_call_operand.vmem [shape: s32[8], index: 1, kind: input, shape index: {}]
  %s2 = inlined_call_operand.vmem [shape: s32[8], index: 2, kind: input, shape index: {}]
  %s3 = inlined_call_operand.hbm [shape: f32[64,128], index: 3, kind: input, shape index: {}]
  %s4 = inlined_call_operand.hbm [shape: f32[16,128], index: 4, kind: input, shape index: {}]
  %s5 = inlined_call_operand.hbm [shape: f32[1,8], index: 5, kind: output, shape index: {}]
  %s6 = sld [smem:[#allocation0]]
  $region154: #{tpu_custom_call.1} parent=0
    _
  %s8 = ssub.s32 1, %s6
  %s9 = scalar_select 0, %s8, %s6
  %11 = dma.hbm_to_smem %s0, 16, [#allocation8], [#allocation7]
  %s12 = sshll.u32 %s1, 4
  %s13 = int_to_ptr.vmem [resolvable:$true] %s12
  %15 = dma.vmem_to_smem %s13, 16, [#allocation9], [#allocation7]
  %s16 = sshll.u32 %s2, 4
  %s17 = int_to_ptr.vmem [resolvable:$true] %s16
  %19 = dma.vmem_to_smem %s17, 16, [#allocation10], [#allocation7]
  %20 = dma.done [#allocation7], 48
  %21 = sfence
  $region1: #{tpu_custom_call.1} parent=0
    #allocation11 [shape = 'u8[8192]{0}', space=vmem, size = 0x2000, scoped, tag = 'input window, operand 4, single buffered']
    #allocation12 [shape = 's32[1]{0}', space=sflag, size = 0x4, scoped, tag = 'scoped memory for tpu_custom_call.1']
    #allocation13 [shape = 's32[1]{0}', space=sflag, size = 0x4, scoped, tag = 'scoped memory for tpu_custom_call.1']
    #allocation14 [shape = 'u8[512]{0}', space=vmem, size = 0x400, scoped, tag = 'output window, operand 0, single buffered']
    %22 = vsyncpa [#allocation12], 0
    %23 = vsyncpa [#allocation13], 0
    // Predicated region
    $region2: #{tpu_custom_call.1} parent=1 // pred_check
      _
    $region3: #{tpu_custom_call.1} parent=1 // pred_check_branch
      %25 = sbr.rel (0) target = $region5
    $region4: #{tpu_custom_call.1} parent=1 // pred_region
      %s27 = ssub.s32 256, 256
      %28 = vsyncadd [#allocation12], %s27
      %s29 = sshll.u32 [#allocation11], 4
      %s30 = int_to_ptr.vmem [resolvable:$true] %s29
      %35 = dma.hbm_to_vmem [thread:$0]  %s4, 256, %s30, [#allocation12], 128, 128, 8
    $region5: #{tpu_custom_call.1} parent=1 // pred_fallthru
      _
    // Predicated region
    $region6: #{tpu_custom_call.1} parent=1 // pred_check
      _
    $region7: #{tpu_custom_call.1} parent=1 // pred_check_branch
      %37 = sbr.rel (0) target = $region9
    $region8: #{tpu_custom_call.1} parent=1 // pred_region
      %38 = dma.done [#allocation12], 256
    $region9: #{tpu_custom_call.1} parent=1 // pred_fallthru
      _
    %s39 = ssub.s32 0, 0
    %s40 = ssub.s32 0, 0
    %p41 = scmp.ne.s32.totalorder 0, 0
    %p42 = scmp.lt.s32.totalorder 0, 0
    %p43 = pnand %p42, %p41
    %p44 = pneg %p43
    %s45 = sadd.s32 0, 2
    %s46 = scalar_select %p44, %s45, 0
    %p47 = scmp.eq.s32.totalorder 0, 0
    // Predicated region
    $region10: #{tpu_custom_call.1} parent=1 // pred_check
      %p48 = pneg %p47
    $region11: #{tpu_custom_call.1} parent=1 // pred_check_branch
      %50 = sbr.rel (%p48) target = $region13
    $region12: #{tpu_custom_call.1} parent=1 // pred_region
      %s51 = sld [smem:[#allocation8]]
      %s52 = sld [smem:[#allocation10]]
      %s53 = smul.addr %s51, 16
      %s54 = scalar_lea.hbm %s3, %s53
      // Predicated region
      $region14: #{tpu_custom_call.1} parent=12 // pred_check
        _
      $region15: #{tpu_custom_call.1} parent=12 // pred_check_branch
        %56 = sbr.rel target = $region17
      $region16: #{tpu_custom_call.1} parent=12 // pred_region
        %57 = sst [smem:[#allocation17]] [#allocation16]
        %58 = sst [smem:[#allocation18]] [#allocation15]
      $region17: #{tpu_custom_call.1} parent=12 // pred_fallthru
        _
      %60 = shalt.err (0)
      %s62 = sshll.u32 [#allocation2], 4
      %s63 = int_to_ptr.vmem [resolvable:$true] %s62
      %65 = dma.hbm_to_vmem [thread:$0]  %s54, 16, %s63, [#allocation5]
      %s66 = smul.addr %s52, 16
      %s67 = scalar_lea.hbm %s3, %s66
      // Predicated region
      $region18: #{tpu_custom_call.1} parent=12 // pred_check
        _
      $region19: #{tpu_custom_call.1} parent=12 // pred_check_branch
        %69 = sbr.rel target = $region21
      $region20: #{tpu_custom_call.1} parent=12 // pred_region
        %70 = sst [smem:[#allocation17]] [#allocation20]
        %71 = sst [smem:[#allocation18]] [#allocation19]
      $region21: #{tpu_custom_call.1} parent=12 // pred_fallthru
        _
      %73 = shalt.err (0)
      %s75 = sshll.u32 [#allocation3], 4
      %s76 = int_to_ptr.vmem [resolvable:$true] %s75
      %78 = dma.hbm_to_vmem [thread:$0]  %s67, 16, %s76, [#allocation6]
      %s79 = sld [smem:[#allocation8 + $0x1]]
      %s80 = sld [smem:[#allocation10 + $0x1]]
      %s81 = smul.addr %s79, 16
      %s82 = scalar_lea.hbm %s3, %s81
      %s83 = scalar_lea.vmem [#allocation2], 1
      // Predicated region
      $region22: #{tpu_custom_call.1} parent=12 // pred_check
        _
      $region23: #{tpu_custom_call.1} parent=12 // pred_check_branch
        %85 = sbr.rel target = $region25
      $region24: #{tpu_custom_call.1} parent=12 // pred_region
        %86 = sst [smem:[#allocation17]] [#allocation22]
        %87 = sst [smem:[#allocation18]] [#allocation21]
      $region25: #{tpu_custom_call.1} parent=12 // pred_fallthru
        _
      %89 = shalt.err (0)
      %s91 = sshll.u32 %s83, 4
      %s92 = int_to_ptr.vmem [resolvable:$true] %s91
      %94 = dma.hbm_to_vmem [thread:$0]  %s82, 16, %s92, [#allocation5]
      %s95 = smul.addr %s80, 16
      %s96 = scalar_lea.hbm %s3, %s95
      %s97 = scalar_lea.vmem [#allocation3], 1
      // Predicated region
      $region26: #{tpu_custom_call.1} parent=12 // pred_check
        _
      $region27: #{tpu_custom_call.1} parent=12 // pred_check_branch
        %99 = sbr.rel target = $region29
      $region28: #{tpu_custom_call.1} parent=12 // pred_region
        %100 = sst [smem:[#allocation17]] [#allocation24]
        %101 = sst [smem:[#allocation18]] [#allocation23]
      $region29: #{tpu_custom_call.1} parent=12 // pred_fallthru
        _
      %103 = shalt.err (0)
      %s105 = sshll.u32 %s97, 4
      %s106 = int_to_ptr.vmem [resolvable:$true] %s105
      %108 = dma.hbm_to_vmem [thread:$0]  %s96, 16, %s106, [#allocation6]
      %s109 = sld [smem:[#allocation8 + $0x2]]
      %s110 = sld [smem:[#allocation10 + $0x2]]
      %s111 = smul.addr %s109, 16
      %s112 = scalar_lea.hbm %s3, %s111
      %s113 = scalar_lea.vmem [#allocation2], 2
      // Predicated region
      $region30: #{tpu_custom_call.1} parent=12 // pred_check
        _
      $region31: #{tpu_custom_call.1} parent=12 // pred_check_branch
        %115 = sbr.rel target = $region33
      $region32: #{tpu_custom_call.1} parent=12 // pred_region
        %116 = sst [smem:[#allocation17]] [#allocation26]
        %117 = sst [smem:[#allocation18]] [#allocation25]
      $region33: #{tpu_custom_call.1} parent=12 // pred_fallthru
        _
      %119 = shalt.err (0)
      %s121 = sshll.u32 %s113, 4
      %s122 = int_to_ptr.vmem [resolvable:$true] %s121
      %124 = dma.hbm_to_vmem [thread:$0]  %s112, 16, %s122, [#allocation5]
      %s125 = smul.addr %s110, 16
      %s126 = scalar_lea.hbm %s3, %s125
      %s127 = scalar_lea.vmem [#allocation3], 2
      // Predicated region
      $region34: #{tpu_custom_call.1} parent=12 // pred_check
        _
      $region35: #{tpu_custom_call.1} parent=12 // pred_check_branch
        %129 = sbr.rel target = $region37
      $region36: #{tpu_custom_call.1} parent=12 // pred_region
        %130 = sst [smem:[#allocation17]] [#allocation28]
        %131 = sst [smem:[#allocation18]] [#allocation27]
      $region37: #{tpu_custom_call.1} parent=12 // pred_fallthru
        _
      %133 = shalt.err (0)
      %s135 = sshll.u32 %s127, 4
      %s136 = int_to_ptr.vmem [resolvable:$true] %s135
      %138 = dma.hbm_to_vmem [thread:$0]  %s126, 16, %s136, [#allocation6]
      %s139 = sld [smem:[#allocation8 + $0x3]]
      %s140 = sld [smem:[#allocation10 + $0x3]]
      %s141 = smul.addr %s139, 16
      %s142 = scalar_lea.hbm %s3, %s141
      %s143 = scalar_lea.vmem [#allocation2], 3
      // Predicated region
      $region38: #{tpu_custom_call.1} parent=12 // pred_check
        _
      $region39: #{tpu_custom_call.1} parent=12 // pred_check_branch
        %145 = sbr.rel target = $region41
      $region40: #{tpu_custom_call.1} parent=12 // pred_region
        %146 = sst [smem:[#allocation17]] [#allocation30]
        %147 = sst [smem:[#allocation18]] [#allocation29]
      $region41: #{tpu_custom_call.1} parent=12 // pred_fallthru
        _
      %149 = shalt.err (0)
      %s151 = sshll.u32 %s143, 4
      %s152 = int_to_ptr.vmem [resolvable:$true] %s151
      %154 = dma.hbm_to_vmem [thread:$0]  %s142, 16, %s152, [#allocation5]
      %s155 = smul.addr %s140, 16
      %s156 = scalar_lea.hbm %s3, %s155
      %s157 = scalar_lea.vmem [#allocation3], 3
      // Predicated region
      $region42: #{tpu_custom_call.1} parent=12 // pred_check
        _
      $region43: #{tpu_custom_call.1} parent=12 // pred_check_branch
        %159 = sbr.rel target = $region45
      $region44: #{tpu_custom_call.1} parent=12 // pred_region
        %160 = sst [smem:[#allocation17]] [#allocation32]
        %161 = sst [smem:[#allocation18]] [#allocation31]
      $region45: #{tpu_custom_call.1} parent=12 // pred_fallthru
        _
      %163 = shalt.err (0)
      %s165 = sshll.u32 %s157, 4
      %s166 = int_to_ptr.vmem [resolvable:$true] %s165
      %168 = dma.hbm_to_vmem [thread:$0]  %s156, 16, %s166, [#allocation6]
      %s169 = sld [smem:[#allocation8 + $0x4]]
      %s170 = sld [smem:[#allocation10 + $0x4]]
      %s171 = smul.addr %s169, 16
      %s172 = scalar_lea.hbm %s3, %s171
      %s173 = scalar_lea.vmem [#allocation2], 4
      // Predicated region
      $region46: #{tpu_custom_call.1} parent=12 // pred_check
        _
      $region47: #{tpu_custom_call.1} parent=12 // pred_check_branch
        %175 = sbr.rel target = $region49
      $region48: #{tpu_custom_call.1} parent=12 // pred_region
        %176 = sst [smem:[#allocation17]] [#allocation34]
        %177 = sst [smem:[#allocation18]] [#allocation33]
      $region49: #{tpu_custom_call.1} parent=12 // pred_fallthru
        _
      %179 = shalt.err (0)
      %s181 = sshll.u32 %s173, 4
      %s182 = int_to_ptr.vmem [resolvable:$true] %s181
      %184 = dma.hbm_to_vmem [thread:$0]  %s172, 16, %s182, [#allocation5]
      %s185 = smul.addr %s170, 16
      %s186 = scalar_lea.hbm %s3, %s185
      %s187 = scalar_lea.vmem [#allocation3], 4
      // Predicated region
      $region50: #{tpu_custom_call.1} parent=12 // pred_check
        _
      $region51: #{tpu_custom_call.1} parent=12 // pred_check_branch
        %189 = sbr.rel target = $region53
      $region52: #{tpu_custom_call.1} parent=12 // pred_region
        %190 = sst [smem:[#allocation17]] [#allocation36]
        %191 = sst [smem:[#allocation18]] [#allocation35]
      $region53: #{tpu_custom_call.1} parent=12 // pred_fallthru
        _
      %193 = shalt.err (0)
      %s195 = sshll.u32 %s187, 4
      %s196 = int_to_ptr.vmem [resolvable:$true] %s195
      %198 = dma.hbm_to_vmem [thread:$0]  %s186, 16, %s196, [#allocation6]
      %s199 = sld [smem:[#allocation8 + $0x5]]
      %s200 = sld [smem:[#allocation10 + $0x5]]
      %s201 = smul.addr %s199, 16
      %s202 = scalar_lea.hbm %s3, %s201
      %s203 = scalar_lea.vmem [#allocation2], 5
      // Predicated region
      $region54: #{tpu_custom_call.1} parent=12 // pred_check
        _
      $region55: #{tpu_custom_call.1} parent=12 // pred_check_branch
        %205 = sbr.rel target = $region57
      $region56: #{tpu_custom_call.1} parent=12 // pred_region
        %206 = sst [smem:[#allocation17]] [#allocation38]
        %207 = sst [smem:[#allocation18]] [#allocation37]
      $region57: #{tpu_custom_call.1} parent=12 // pred_fallthru
        _
      %209 = shalt.err (0)
      %s211 = sshll.u32 %s203, 4
      %s212 = int_to_ptr.vmem [resolvable:$true] %s211
      %214 = dma.hbm_to_vmem [thread:$0]  %s202, 16, %s212, [#allocation5]
      %s215 = smul.addr %s200, 16
      %s216 = scalar_lea.hbm %s3, %s215
      %s217 = scalar_lea.vmem [#allocation3], 5
      // Predicated region
      $region58: #{tpu_custom_call.1} parent=12 // pred_check
        _
      $region59: #{tpu_custom_call.1} parent=12 // pred_check_branch
        %219 = sbr.rel target = $region61
      $region60: #{tpu_custom_call.1} parent=12 // pred_region
        %220 = sst [smem:[#allocation17]] [#allocation40]
        %221 = sst [smem:[#allocation18]] [#allocation39]
      $region61: #{tpu_custom_call.1} parent=12 // pred_fallthru
        _
      %223 = shalt.err (0)
      %s225 = sshll.u32 %s217, 4
      %s226 = int_to_ptr.vmem [resolvable:$true] %s225
      %228 = dma.hbm_to_vmem [thread:$0]  %s216, 16, %s226, [#allocation6]
      %s229 = sld [smem:[#allocation8 + $0x6]]
      %s230 = sld [smem:[#allocation10 + $0x6]]
      %s231 = smul.addr %s229, 16
      %s232 = scalar_lea.hbm %s3, %s231
      %s233 = scalar_lea.vmem [#allocation2], 6
      // Predicated region
      $region62: #{tpu_custom_call.1} parent=12 // pred_check
        _
      $region63: #{tpu_custom_call.1} parent=12 // pred_check_branch
        %235 = sbr.rel target = $region65
      $region64: #{tpu_custom_call.1} parent=12 // pred_region
        %236 = sst [smem:[#allocation17]] [#allocation42]
        %237 = sst [smem:[#allocation18]] [#allocation41]
      $region65: #{tpu_custom_call.1} parent=12 // pred_fallthru
        _
      %239 = shalt.err (0)
      %s241 = sshll.u32 %s233, 4
      %s242 = int_to_ptr.vmem [resolvable:$true] %s241
      %244 = dma.hbm_to_vmem [thread:$0]  %s232, 16, %s242, [#allocation5]
      %s245 = smul.addr %s230, 16
      %s246 = scalar_lea.hbm %s3, %s245
      %s247 = scalar_lea.vmem [#allocation3], 6
      // Predicated region
      $region66: #{tpu_custom_call.1} parent=12 // pred_check
        _
      $region67: #{tpu_custom_call.1} parent=12 // pred_check_branch
        %249 = sbr.rel target = $region69
      $region68: #{tpu_custom_call.1} parent=12 // pred_region
        %250 = sst [smem:[#allocation17]] [#allocation44]
        %251 = sst [smem:[#allocation18]] [#allocation43]
      $region69: #{tpu_custom_call.1} parent=12 // pred_fallthru
        _
      %253 = shalt.err (0)
      %s255 = sshll.u32 %s247, 4
      %s256 = int_to_ptr.vmem [resolvable:$true] %s255
      %258 = dma.hbm_to_vmem [thread:$0]  %s246, 16, %s256, [#allocation6]
      %s259 = sld [smem:[#allocation8 + $0x7]]
      %s260 = sld [smem:[#allocation10 + $0x7]]
      %s261 = smul.addr %s259, 16
      %s262 = scalar_lea.hbm %s3, %s261
      %s263 = scalar_lea.vmem [#allocation2], 7
      // Predicated region
      $region70: #{tpu_custom_call.1} parent=12 // pred_check
        _
      $region71: #{tpu_custom_call.1} parent=12 // pred_check_branch
        %265 = sbr.rel target = $region73
      $region72: #{tpu_custom_call.1} parent=12 // pred_region
        %266 = sst [smem:[#allocation17]] [#allocation46]
        %267 = sst [smem:[#allocation18]] [#allocation45]
      $region73: #{tpu_custom_call.1} parent=12 // pred_fallthru
        _
      %269 = shalt.err (0)
      %s271 = sshll.u32 %s263, 4
      %s272 = int_to_ptr.vmem [resolvable:$true] %s271
      %274 = dma.hbm_to_vmem [thread:$0]  %s262, 16, %s272, [#allocation5]
      %s275 = smul.addr %s260, 16
      %s276 = scalar_lea.hbm %s3, %s275
      %s277 = scalar_lea.vmem [#allocation3], 7
      // Predicated region
      $region74: #{tpu_custom_call.1} parent=12 // pred_check
        _
      $region75: #{tpu_custom_call.1} parent=12 // pred_check_branch
        %279 = sbr.rel target = $region77
      $region76: #{tpu_custom_call.1} parent=12 // pred_region
        %280 = sst [smem:[#allocation17]] [#allocation48]
        %281 = sst [smem:[#allocation18]] [#allocation47]
      $region77: #{tpu_custom_call.1} parent=12 // pred_fallthru
        _
      %283 = shalt.err (0)
      %s285 = sshll.u32 %s277, 4
      %s286 = int_to_ptr.vmem [resolvable:$true] %s285
      %288 = dma.hbm_to_vmem [thread:$0]  %s276, 16, %s286, [#allocation6]
    $region13: #{tpu_custom_call.1} parent=1 // pred_fallthru
      _
    %s289 = sadd.s32 0, 1
    %p290 = scmp.lt.s32.totalorder %s289, 1
    // Predicated region
    $region78: #{tpu_custom_call.1} parent=1 // pred_check
      %p291 = pneg %p290
    $region79: #{tpu_custom_call.1} parent=1 // pred_check_branch
      %293 = sbr.rel (%p291) target = $region81
    $region80: #{tpu_custom_call.1} parent=1 // pred_region
      %p294 = scmp.lt.s32.totalorder %s289, 0
      %s295 = ssub.s32 0, %s289
      %s296 = scalar_select %p294, %s295, %s289
      %s297 = sand.u32 %s296, 1
      %s298 = ssub.s32 0, %s297
      %s299 = scalar_select %p294, %s298, %s297
      %p300 = scmp.ne.s32.totalorder %s299, 0
      %p301 = scmp.lt.s32.totalorder %s299, 0
      %p302 = pnand %p301, %p300
      %p303 = pneg %p302
      %s304 = sadd.s32 %s299, 2
      %s305 = scalar_select %p303, %s304, %s299
      %s306 = smul.u32 %s289, 8
      %s307 = sld [smem:[#allocation8 + %s306]]
      %s308 = sld [smem:[#allocation10 + %s306]]
      %s309 = smul.addr %s307, 16
      %s310 = scalar_lea.hbm %s3, %s309
      %s311 = smul.u32 %s305, 8
      %s312 = scalar_lea.vmem [#allocation2], %s311
      %s313 = scalar_lea.sflag [#allocation5], %s305
      // Predicated region
      $region82: #{tpu_custom_call.1} parent=80 // pred_check
        _
      $region83: #{tpu_custom_call.1} parent=80 // pred_check_branch
        %315 = sbr.rel target = $region85
      $region84: #{tpu_custom_call.1} parent=80 // pred_region
        %316 = sst [smem:[#allocation17]] [#allocation50]
        %317 = sst [smem:[#allocation18]] [#allocation49]
      $region85: #{tpu_custom_call.1} parent=80 // pred_fallthru
        _
      %319 = shalt.err (0)
      %s321 = sshll.u32 %s312, 4
      %s322 = int_to_ptr.vmem [resolvable:$true] %s321
      %324 = dma.hbm_to_vmem [thread:$0]  %s310, 16, %s322, %s313
      %s325 = smul.addr %s308, 16
      %s326 = scalar_lea.hbm %s3, %s325
      %s327 = scalar_lea.vmem [#allocation3], %s311
      %s328 = scalar_lea.sflag [#allocation6], %s305
      // Predicated region
      $region86: #{tpu_custom_call.1} parent=80 // pred_check
        _
      $region87: #{tpu_custom_call.1} parent=80 // pred_check_branch
        %330 = sbr.rel target = $region89
      $region88: #{tpu_custom_call.1} parent=80 // pred_region
        %331 = sst [smem:[#allocation17]] [#allocation52]
        %332 = sst [smem:[#allocation18]] [#allocation51]
      $region89: #{tpu_custom_call.1} parent=80 // pred_fallthru
        _
      %334 = shalt.err (0)
      %s336 = sshll.u32 %s327, 4
      %s337 = int_to_ptr.vmem [resolvable:$true] %s336
      %339 = dma.hbm_to_vmem [thread:$0]  %s326, 16, %s337, %s328
      %s340 = sadd.s32 %s306, 1
      %s341 = sld [smem:[#allocation8 + %s340]]
      %s342 = sld [smem:[#allocation10 + %s340]]
      %s343 = smul.addr %s341, 16
      %s344 = scalar_lea.hbm %s3, %s343
      %s345 = sadd.s32 1, %s311
      %s346 = scalar_lea.vmem [#allocation2], %s345
      // Predicated region
      $region90: #{tpu_custom_call.1} parent=80 // pred_check
        _
      $region91: #{tpu_custom_call.1} parent=80 // pred_check_branch
        %348 = sbr.rel target = $region93
      $region92: #{tpu_custom_call.1} parent=80 // pred_region
        %349 = sst [smem:[#allocation17]] [#allocation54]
        %350 = sst [smem:[#allocation18]] [#allocation53]
      $region93: #{tpu_custom_call.1} parent=80 // pred_fallthru
        _
      %352 = shalt.err (0)
      %s354 = sshll.u32 %s346, 4
      %s355 = int_to_ptr.vmem [resolvable:$true] %s354
      %357 = dma.hbm_to_vmem [thread:$0]  %s344, 16, %s355, %s313
      %s358 = smul.addr %s342, 16
      %s359 = scalar_lea.hbm %s3, %s358
      %s360 = scalar_lea.vmem [#allocation3], %s345
      // Predicated region
      $region94: #{tpu_custom_call.1} parent=80 // pred_check
        _
      $region95: #{tpu_custom_call.1} parent=80 // pred_check_branch
        %362 = sbr.rel target = $region97
      $region96: #{tpu_custom_call.1} parent=80 // pred_region
        %363 = sst [smem:[#allocation17]] [#allocation56]
        %364 = sst [smem:[#allocation18]] [#allocation55]
      $region97: #{tpu_custom_call.1} parent=80 // pred_fallthru
        _
      %366 = shalt.err (0)
      %s368 = sshll.u32 %s360, 4
      %s369 = int_to_ptr.vmem [resolvable:$true] %s368
      %371 = dma.hbm_to_vmem [thread:$0]  %s359, 16, %s369, %s328
      %s372 = sadd.s32 %s306, 2
      %s373 = sld [smem:[#allocation8 + %s372]]
      %s374 = sld [smem:[#allocation10 + %s372]]
      %s375 = smul.addr %s373, 16
      %s376 = scalar_lea.hbm %s3, %s375
      %s377 = sadd.s32 2, %s311
      %s378 = scalar_lea.vmem [#allocation2], %s377
      // Predicated region
      $region98: #{tpu_custom_call.1} parent=80 // pred_check
        _
      $region99: #{tpu_custom_call.1} parent=80 // pred_check_branch
        %380 = sbr.rel target = $region101
      $region100: #{tpu_custom_call.1} parent=80 // pred_region
        %381 = sst [smem:[#allocation17]] [#allocation58]
        %382 = sst [smem:[#allocation18]] [#allocation57]
      $region101: #{tpu_custom_call.1} parent=80 // pred_fallthru
        _
      %384 = shalt.err (0)
      %s386 = sshll.u32 %s378, 4
      %s387 = int_to_ptr.vmem [resolvable:$true] %s386
      %389 = dma.hbm_to_vmem [thread:$0]  %s376, 16, %s387, %s313
      %s390 = smul.addr %s374, 16
      %s391 = scalar_lea.hbm %s3, %s390
      %s392 = scalar_lea.vmem [#allocation3], %s377
      // Predicated region
      $region102: #{tpu_custom_call.1} parent=80 // pred_check
        _
      $region103: #{tpu_custom_call.1} parent=80 // pred_check_branch
        %394 = sbr.rel target = $region105
      $region104: #{tpu_custom_call.1} parent=80 // pred_region
        %395 = sst [smem:[#allocation17]] [#allocation60]
        %396 = sst [smem:[#allocation18]] [#allocation59]
      $region105: #{tpu_custom_call.1} parent=80 // pred_fallthru
        _
      %398 = shalt.err (0)
      %s400 = sshll.u32 %s392, 4
      %s401 = int_to_ptr.vmem [resolvable:$true] %s400
      %403 = dma.hbm_to_vmem [thread:$0]  %s391, 16, %s401, %s328
      %s404 = sadd.s32 %s306, 3
      %s405 = sld [smem:[#allocation8 + %s404]]
      %s406 = sld [smem:[#allocation10 + %s404]]
      %s407 = smul.addr %s405, 16
      %s408 = scalar_lea.hbm %s3, %s407
      %s409 = sadd.s32 3, %s311
      %s410 = scalar_lea.vmem [#allocation2], %s409
      // Predicated region
      $region106: #{tpu_custom_call.1} parent=80 // pred_check
        _
      $region107: #{tpu_custom_call.1} parent=80 // pred_check_branch
        %412 = sbr.rel target = $region109
      $region108: #{tpu_custom_call.1} parent=80 // pred_region
        %413 = sst [smem:[#allocation17]] [#allocation62]
        %414 = sst [smem:[#allocation18]] [#allocation61]
      $region109: #{tpu_custom_call.1} parent=80 // pred_fallthru
        _
      %416 = shalt.err (0)
      %s418 = sshll.u32 %s410, 4
      %s419 = int_to_ptr.vmem [resolvable:$true] %s418
      %421 = dma.hbm_to_vmem [thread:$0]  %s408, 16, %s419, %s313
      %s422 = smul.addr %s406, 16
      %s423 = scalar_lea.hbm %s3, %s422
      %s424 = scalar_lea.vmem [#allocation3], %s409
      // Predicated region
      $region110: #{tpu_custom_call.1} parent=80 // pred_check
        _
      $region111: #{tpu_custom_call.1} parent=80 // pred_check_branch
        %426 = sbr.rel target = $region113
      $region112: #{tpu_custom_call.1} parent=80 // pred_region
        %427 = sst [smem:[#allocation17]] [#allocation64]
        %428 = sst [smem:[#allocation18]] [#allocation63]
      $region113: #{tpu_custom_call.1} parent=80 // pred_fallthru
        _
      %430 = shalt.err (0)
      %s432 = sshll.u32 %s424, 4
      %s433 = int_to_ptr.vmem [resolvable:$true] %s432
      %435 = dma.hbm_to_vmem [thread:$0]  %s423, 16, %s433, %s328
      %s436 = sadd.s32 %s306, 4
      %s437 = sld [smem:[#allocation8 + %s436]]
      %s438 = sld [smem:[#allocation10 + %s436]]
      %s439 = smul.addr %s437, 16
      %s440 = scalar_lea.hbm %s3, %s439
      %s441 = sadd.s32 4, %s311
      %s442 = scalar_lea.vmem [#allocation2], %s441
      // Predicated region
      $region114: #{tpu_custom_call.1} parent=80 // pred_check
        _
      $region115: #{tpu_custom_call.1} parent=80 // pred_check_branch
        %444 = sbr.rel target = $region117
      $region116: #{tpu_custom_call.1} parent=80 // pred_region
        %445 = sst [smem:[#allocation17]] [#allocation66]
        %446 = sst [smem:[#allocation18]] [#allocation65]
      $region117: #{tpu_custom_call.1} parent=80 // pred_fallthru
        _
      %448 = shalt.err (0)
      %s450 = sshll.u32 %s442, 4
      %s451 = int_to_ptr.vmem [resolvable:$true] %s450
      %453 = dma.hbm_to_vmem [thread:$0]  %s440, 16, %s451, %s313
      %s454 = smul.addr %s438, 16
      %s455 = scalar_lea.hbm %s3, %s454
      %s456 = scalar_lea.vmem [#allocation3], %s441
      // Predicated region
      $region118: #{tpu_custom_call.1} parent=80 // pred_check
        _
      $region119: #{tpu_custom_call.1} parent=80 // pred_check_branch
        %458 = sbr.rel target = $region121
      $region120: #{tpu_custom_call.1} parent=80 // pred_region
        %459 = sst [smem:[#allocation17]] [#allocation68]
        %460 = sst [smem:[#allocation18]] [#allocation67]
      $region121: #{tpu_custom_call.1} parent=80 // pred_fallthru
        _
      %462 = shalt.err (0)
      %s464 = sshll.u32 %s456, 4
      %s465 = int_to_ptr.vmem [resolvable:$true] %s464
      %467 = dma.hbm_to_vmem [thread:$0]  %s455, 16, %s465, %s328
      %s468 = sadd.s32 %s306, 5
      %s469 = sld [smem:[#allocation8 + %s468]]
      %s470 = sld [smem:[#allocation10 + %s468]]
      %s471 = smul.addr %s469, 16
      %s472 = scalar_lea.hbm %s3, %s471
      %s473 = sadd.s32 5, %s311
      %s474 = scalar_lea.vmem [#allocation2], %s473
      // Predicated region
      $region122: #{tpu_custom_call.1} parent=80 // pred_check
        _
      $region123: #{tpu_custom_call.1} parent=80 // pred_check_branch
        %476 = sbr.rel target = $region125
      $region124: #{tpu_custom_call.1} parent=80 // pred_region
        %477 = sst [smem:[#allocation17]] [#allocation70]
        %478 = sst [smem:[#allocation18]] [#allocation69]
      $region125: #{tpu_custom_call.1} parent=80 // pred_fallthru
        _
      %480 = shalt.err (0)
      %s482 = sshll.u32 %s474, 4
      %s483 = int_to_ptr.vmem [resolvable:$true] %s482
      %485 = dma.hbm_to_vmem [thread:$0]  %s472, 16, %s483, %s313
      %s486 = smul.addr %s470, 16
      %s487 = scalar_lea.hbm %s3, %s486
      %s488 = scalar_lea.vmem [#allocation3], %s473
      // Predicated region
      $region126: #{tpu_custom_call.1} parent=80 // pred_check
        _
      $region127: #{tpu_custom_call.1} parent=80 // pred_check_branch
        %490 = sbr.rel target = $region129
      $region128: #{tpu_custom_call.1} parent=80 // pred_region
        %491 = sst [smem:[#allocation17]] [#allocation72]
        %492 = sst [smem:[#allocation18]] [#allocation71]
      $region129: #{tpu_custom_call.1} parent=80 // pred_fallthru
        _
      %494 = shalt.err (0)
      %s496 = sshll.u32 %s488, 4
      %s497 = int_to_ptr.vmem [resolvable:$true] %s496
      %499 = dma.hbm_to_vmem [thread:$0]  %s487, 16, %s497, %s328
      %s500 = sadd.s32 %s306, 6
      %s501 = sld [smem:[#allocation8 + %s500]]
      %s502 = sld [smem:[#allocation10 + %s500]]
      %s503 = smul.addr %s501, 16
      %s504 = scalar_lea.hbm %s3, %s503
      %s505 = sadd.s32 6, %s311
      %s506 = scalar_lea.vmem [#allocation2], %s505
      // Predicated region
      $region130: #{tpu_custom_call.1} parent=80 // pred_check
        _
      $region131: #{tpu_custom_call.1} parent=80 // pred_check_branch
        %508 = sbr.rel target = $region133
      $region132: #{tpu_custom_call.1} parent=80 // pred_region
        %509 = sst [smem:[#allocation17]] [#allocation74]
        %510 = sst [smem:[#allocation18]] [#allocation73]
      $region133: #{tpu_custom_call.1} parent=80 // pred_fallthru
        _
      %512 = shalt.err (0)
      %s514 = sshll.u32 %s506, 4
      %s515 = int_to_ptr.vmem [resolvable:$true] %s514
      %517 = dma.hbm_to_vmem [thread:$0]  %s504, 16, %s515, %s313
      %s518 = smul.addr %s502, 16
      %s519 = scalar_lea.hbm %s3, %s518
      %s520 = scalar_lea.vmem [#allocation3], %s505
      // Predicated region
      $region134: #{tpu_custom_call.1} parent=80 // pred_check
        _
      $region135: #{tpu_custom_call.1} parent=80 // pred_check_branch
        %522 = sbr.rel target = $region137
      $region136: #{tpu_custom_call.1} parent=80 // pred_region
        %523 = sst [smem:[#allocation17]] [#allocation76]
        %524 = sst [smem:[#allocation18]] [#allocation75]
      $region137: #{tpu_custom_call.1} parent=80 // pred_fallthru
        _
      %526 = shalt.err (0)
      %s528 = sshll.u32 %s520, 4
      %s529 = int_to_ptr.vmem [resolvable:$true] %s528
      %531 = dma.hbm_to_vmem [thread:$0]  %s519, 16, %s529, %s328
      %s532 = sadd.s32 %s306, 7
      %s533 = sld [smem:[#allocation8 + %s532]]
      %s534 = sld [smem:[#allocation10 + %s532]]
      %s535 = smul.addr %s533, 16
      %s536 = scalar_lea.hbm %s3, %s535
      %s537 = sadd.s32 7, %s311
      %s538 = scalar_lea.vmem [#allocation2], %s537
      // Predicated region
      $region138: #{tpu_custom_call.1} parent=80 // pred_check
        _
      $region139: #{tpu_custom_call.1} parent=80 // pred_check_branch
        %540 = sbr.rel target = $region141
      $region140: #{tpu_custom_call.1} parent=80 // pred_region
        %541 = sst [smem:[#allocation17]] [#allocation78]
        %542 = sst [smem:[#allocation18]] [#allocation77]
      $region141: #{tpu_custom_call.1} parent=80 // pred_fallthru
        _
      %544 = shalt.err (0)
      %s546 = sshll.u32 %s538, 4
      %s547 = int_to_ptr.vmem [resolvable:$true] %s546
      %549 = dma.hbm_to_vmem [thread:$0]  %s536, 16, %s547, %s313
      %s550 = smul.addr %s534, 16
      %s551 = scalar_lea.hbm %s3, %s550
      %s552 = scalar_lea.vmem [#allocation3], %s537
      // Predicated region
      $region142: #{tpu_custom_call.1} parent=80 // pred_check
        _
      $region143: #{tpu_custom_call.1} parent=80 // pred_check_branch
        %554 = sbr.rel target = $region145
      $region144: #{tpu_custom_call.1} parent=80 // pred_region
        %555 = sst [smem:[#allocation17]] [#allocation80]
        %556 = sst [smem:[#allocation18]] [#allocation79]
      $region145: #{tpu_custom_call.1} parent=80 // pred_fallthru
        _
      %558 = shalt.err (0)
      %s560 = sshll.u32 %s552, 4
      %s561 = int_to_ptr.vmem [resolvable:$true] %s560
      %563 = dma.hbm_to_vmem [thread:$0]  %s551, 16, %s561, %s328
    $region81: #{tpu_custom_call.1} parent=1 // pred_fallthru
      _
    %s564 = smul.u32 0, 8
    %s565 = sld [smem:[#allocation9 + %s564]]
    %s566 = scalar_lea.vmem [#allocation11], %s565
    %v567 = vld [vmem:[%s566] sm:$0x1]
    %568 = vst [vmem:[#allocation4] sm:$0x1] %v567
    %s569 = sadd.s32 %s564, 1
    %s570 = sld [smem:[#allocation9 + %s569]]
    %s571 = scalar_lea.vmem [#allocation11], %s570
    %v572 = vld [vmem:[%s571] sm:$0x1]
    %573 = vst [vmem:[#allocation4 + $0x1] sm:$0x1] %v572
    %s574 = sadd.s32 %s564, 2
    %s575 = sld [smem:[#allocation9 + %s574]]
    %s576 = scalar_lea.vmem [#allocation11], %s575
    %v577 = vld [vmem:[%s576] sm:$0x1]
    %578 = vst [vmem:[#allocation4 + $0x2] sm:$0x1] %v577
    %s579 = sadd.s32 %s564, 3
    %s580 = sld [smem:[#allocation9 + %s579]]
    %s581 = scalar_lea.vmem [#allocation11], %s580
    %v582 = vld [vmem:[%s581] sm:$0x1]
    %583 = vst [vmem:[#allocation4 + $0x3] sm:$0x1] %v582
    %s584 = sadd.s32 %s564, 4
    %s585 = sld [smem:[#allocation9 + %s584]]
    %s586 = scalar_lea.vmem [#allocation11], %s585
    %v587 = vld [vmem:[%s586] sm:$0x1]
    %588 = vst [vmem:[#allocation4 + $0x4] sm:$0x1] %v587
    %s589 = sadd.s32 %s564, 5
    %s590 = sld [smem:[#allocation9 + %s589]]
    %s591 = scalar_lea.vmem [#allocation11], %s590
    %v592 = vld [vmem:[%s591] sm:$0x1]
    %593 = vst [vmem:[#allocation4 + $0x5] sm:$0x1] %v592
    %s594 = sadd.s32 %s564, 6
    %s595 = sld [smem:[#allocation9 + %s594]]
    %s596 = scalar_lea.vmem [#allocation11], %s595
    %v597 = vld [vmem:[%s596] sm:$0x1]
    %598 = vst [vmem:[#allocation4 + $0x6] sm:$0x1] %v597
    %s599 = sadd.s32 %s564, 7
    %s600 = sld [smem:[#allocation9 + %s599]]
    %s601 = scalar_lea.vmem [#allocation11], %s600
    %v602 = vld [vmem:[%s601] sm:$0x1]
    %603 = vst [vmem:[#allocation4 + $0x7] sm:$0x1] %v602
    %s604 = smul.u32 %s46, 8
    %s605 = scalar_lea.vmem [#allocation2], %s604
    %s606 = scalar_lea.sflag [#allocation5], %s46
    %s607 = smul.u32 8, 1
    %s608 = sshll.u32 %s607, 4
    %609 = dma.done %s606, %s608
    %s610 = scalar_lea.vmem [#allocation3], %s604
    %s611 = scalar_lea.sflag [#allocation6], %s46
    %s612 = sshll.u32 %s607, 4
    %613 = dma.done %s611, %s612
    %v614 = vld [vmem:[%s605] sm:$0xff]
    %v615 = vld [vmem:[#allocation4] sm:$0xff]
    %v616 = vadd.f32 %v614, %v615
    %v617 = vld [vmem:[%s610] sm:$0xff]
    %v618 = vsub.f32 %v616, %v617
    %v619 = vand.u32 2147483647, %v618
    %620 = vadd.xlane.f32.xlu0 %v619
    %v621 = vpop.xlane.xlu0 %620
    %v622 = vsub.f32 12.0, %v621
    %v624 = vlaneseq
    %v625 = vand.u32 %v624, 127
    %v626 = vlaneseq
    %v627 = vshrl.u32 %v626, 7
    %v628 = vsub.s32 %v625, %v627
    %v629 = vrot.slane %v622, %v628
    %vm631 = vcmask 57344
    %632 = vst.msk [vmem:[#allocation14] sm:$0x1] %vm631, %v629
    // Predicated region
    $region146: #{tpu_custom_call.1} parent=1 // pred_check
      _
    $region147: #{tpu_custom_call.1} parent=1 // pred_check_branch
      %634 = sbr.rel (0) target = $region149
    $region148: #{tpu_custom_call.1} parent=1 // pred_region
      %s636 = ssub.s32 16, 16
      %637 = vsyncadd [#allocation13], %s636
      %s639 = sshll.u32 [#allocation14], 4
      %s640 = int_to_ptr.vmem [resolvable:$true] %s639
      %642 = dma.vmem_to_hbm [thread:$0]  %s640, 16, %s5, [#allocation13]
    $region149: #{tpu_custom_call.1} parent=1 // pred_fallthru
      _
    // Predicated region
    $region150: #{tpu_custom_call.1} parent=1 // pred_check
      _
    $region151: #{tpu_custom_call.1} parent=1 // pred_check_branch
      %644 = sbr.rel (0) target = $region153
    $region152: #{tpu_custom_call.1} parent=1 // pred_region
      %645 = dma.done [#allocation13], 16
    $region153: #{tpu_custom_call.1} parent=1 // pred_fallthru
      _
    %646 = vsyncpa [#allocation12], 1
    %647 = vsyncpa [#allocation13], 1
  %648 = vsyncmov [#allocation5]
  %s649 = vpop.sfrf %648
  %p650 = scmp.eq.s32.totalorder %s649, 0
  %p651 = pneg %p650
  %653 = shalt.err (%p651)
  %s654 = scalar_lea.sflag [#allocation5], 1
  %655 = vsyncmov %s654
  %s656 = vpop.sfrf %655
  %p657 = scmp.eq.s32.totalorder %s656, 0
  %p658 = pneg %p657
  %660 = shalt.err (%p658)
  %661 = vsyncmov [#allocation6]
  %s662 = vpop.sfrf %661
  %p663 = scmp.eq.s32.totalorder %s662, 0
  %p664 = pneg %p663
  %666 = shalt.err (%p664)
  %s667 = scalar_lea.sflag [#allocation6], 1
  %668 = vsyncmov %s667
  %s669 = vpop.sfrf %668
  %p670 = scmp.eq.s32.totalorder %s669, 0
  %p671 = pneg %p670
  %673 = shalt.err (%p671)

</llo_original>
